<compile_context>
chip_gen: v7x
topology: tpu7x:2x2x1
jax: 0.10.0
libtpu: 0.0.40
codegen_flags: <defaults>
</compile_context>

<pallas_src>
import functools
import numpy as np
import jax
import jax.numpy as jnp
from jax.experimental import pallas as pl
from jax.experimental.pallas import tpu as pltpu


def _round_up(x, m):
    return ((x + m - 1) // m) * m


def _pick_tile(padded_dim, pref):
    """Largest multiple of 128 that divides padded_dim (a 128-multiple), <= pref."""
    best = 128
    t = 256
    while t <= min(pref, padded_dim):
        if padded_dim % t == 0:
            best = t
        t += 128
    return best


# ----------------------------------------------------------------------------
# Matmul kernels (plain and BN+ReLU-prologue fused), bf16 MXU, f32 accumulation
# ----------------------------------------------------------------------------

def _matmul_kernel(a_ref, b_ref, o_ref, acc_ref):
    @pl.when(pl.program_id(2) == 0)
    def _():
        acc_ref[...] = jnp.zeros_like(acc_ref)

    acc_ref[...] += jnp.dot(a_ref[...].astype(jnp.bfloat16), b_ref[...],
                            preferred_element_type=jnp.float32)

    @pl.when(pl.program_id(2) == pl.num_programs(2) - 1)
    def _():
        o_ref[...] = acc_ref[...].astype(o_ref.dtype)


def _bn_relu_matmul_kernel(a_ref, s_ref, t_ref, b_ref, o_ref, acc_ref):
    # relu(a * scale + shift) @ W  -- BN apply + ReLU fused into the A-load path.
    @pl.when(pl.program_id(2) == 0)
    def _():
        acc_ref[...] = jnp.zeros_like(acc_ref)

    a = jnp.maximum(a_ref[...] * s_ref[...] + t_ref[...], 0.0).astype(jnp.bfloat16)
    acc_ref[...] += jnp.dot(a, b_ref[...], preferred_element_type=jnp.float32)

    @pl.when(pl.program_id(2) == pl.num_programs(2) - 1)
    def _():
        o_ref[...] = acc_ref[...].astype(o_ref.dtype)


@functools.lru_cache(maxsize=None)
def _matmul_call(Mp, Kp, Np, fused):
    tm = _pick_tile(Mp, 512)
    tk = _pick_tile(Kp, 512)
    tn = _pick_tile(Np, 256)
    a_spec = pl.BlockSpec((tm, tk), lambda i, j, k: (i, k))
    b_spec = pl.BlockSpec((tk, tn), lambda i, j, k: (k, j))
    o_spec = pl.BlockSpec((tm, tn), lambda i, j, k: (i, j))
    if fused:
        kernel = _bn_relu_matmul_kernel
        in_specs = [a_spec,
                    pl.BlockSpec((1, tk), lambda i, j, k: (0, k)),
                    pl.BlockSpec((1, tk), lambda i, j, k: (0, k)),
                    b_spec]
    else:
        kernel = _matmul_kernel
        in_specs = [a_spec, b_spec]
    f = pl.pallas_call(
        kernel,
        out_shape=jax.ShapeDtypeStruct((Mp, Np), jnp.float32),
        grid_spec=pltpu.PrefetchScalarGridSpec(
            num_scalar_prefetch=0,
            grid=(Mp // tm, Np // tn, Kp // tk),
            in_specs=in_specs,
            out_specs=o_spec,
            scratch_shapes=[pltpu.VMEM((tm, tn), jnp.float32)]),
        compiler_params=pltpu.CompilerParams(
            dimension_semantics=("parallel", "parallel", "arbitrary")),
    )
    return jax.jit(f)


def pallas_matmul(a, w_padded):
    """a: (M, K) f32/bf16, w_padded: (Kp, Np) bf16 pre-padded.  Returns padded (Mp, Np) f32."""
    M, K = a.shape
    Kp, Np = w_padded.shape
    Mp = _round_up(M, 128)
    if (Mp, Kp) != (M, K):
        a = jnp.pad(a, ((0, Mp - M), (0, Kp - K)))
    return _matmul_call(Mp, Kp, Np, False)(a, w_padded)


def pallas_bn_relu_matmul(a_padded, scale_p, shift_p, w_padded):
    """a_padded: (Mp, >=Kp) f32 raw activation slab; scale/shift: (1, Kp); w: (Kp, Np) bf16."""
    Mp, Ksl = a_padded.shape
    Kp, Np = w_padded.shape
    assert Mp % 128 == 0 and Ksl >= Kp
    return _matmul_call(Mp, Kp, Np, True)(a_padded, scale_p, shift_p, w_padded)


# ----------------------------------------------------------------------------
# BatchNorm statistics (gridded partial sum / sum-of-squares) and BN+ReLU apply
# ----------------------------------------------------------------------------

@functools.lru_cache(maxsize=None)
def _stats_call(Mp, Cp):
    tm = _pick_tile(Mp, 512)

    def kernel(cnt_ref, x_ref, s_ref, q_ref):
        @pl.when(pl.program_id(0) == 0)
        def _():
            s_ref[...] = jnp.zeros_like(s_ref)
            q_ref[...] = jnp.zeros_like(q_ref)
        rows = pl.program_id(0) * tm + jax.lax.broadcasted_iota(jnp.int32, (tm, 1), 0)
        mask = (rows < cnt_ref[0]).astype(jnp.float32)
        x = x_ref[...] * mask
        s_ref[...] += jnp.sum(x, axis=0, keepdims=True)
        q_ref[...] += jnp.sum(x * x, axis=0, keepdims=True)

    f = pl.pallas_call(
        kernel,
        out_shape=(jax.ShapeDtypeStruct((1, Cp), jnp.float32),
                   jax.ShapeDtypeStruct((1, Cp), jnp.float32)),
        grid_spec=pltpu.PrefetchScalarGridSpec(
            num_scalar_prefetch=1,                 # valid row count lives in SMEM
            grid=(Mp // tm,),
            in_specs=[pl.BlockSpec((tm, Cp), lambda i, cnt: (i, 0))],
            out_specs=(pl.BlockSpec((1, Cp), lambda i, cnt: (0, 0)),
                       pl.BlockSpec((1, Cp), lambda i, cnt: (0, 0)))),
        compiler_params=pltpu.CompilerParams(
            dimension_semantics=("arbitrary",)),
    )
    return jax.jit(f)


def batch_stats(x_padded, n_rows, c_read):
    """Per-channel batch mean / inv-std over the first round_up(c_read,128) columns."""
    Mp = x_padded.shape[0]
    Cp = _round_up(c_read, 128)
    cnt = jnp.array([n_rows], dtype=jnp.int32)
    s, q = _stats_call(Mp, Cp)(cnt, x_padded)
    denom = float(n_rows)
    mean = s[0] / denom
    var = jnp.maximum(q[0] / denom - mean * mean, 0.0)
    inv = jax.lax.rsqrt(var + 1e-5)
    return mean, inv                              # each (Cp,)


def _scale_shift(gamma, beta, mean, inv, cp):
    """Fold BN into per-channel scale/shift, padded with zeros to (1, cp)."""
    c = gamma.shape[0]
    sc = gamma * inv[:c]
    scale = jnp.zeros((cp,), jnp.float32).at[:c].set(sc)
    shift = jnp.zeros((cp,), jnp.float32).at[:c].set(beta - mean[:c] * sc)
    return scale[None, :], shift[None, :]


@functools.lru_cache(maxsize=None)
def _bn_relu_apply_call(Mp, Cp):
    tm = _pick_tile(Mp, 512)

    def kernel(x_ref, s_ref, t_ref, o_ref):
        o_ref[...] = jnp.maximum(x_ref[...] * s_ref[...] + t_ref[...], 0.0)

    f = pl.pallas_call(
        kernel,
        out_shape=jax.ShapeDtypeStruct((Mp, Cp), jnp.float32),
        grid_spec=pltpu.PrefetchScalarGridSpec(
            num_scalar_prefetch=0,
            grid=(Mp // tm,),
            in_specs=[pl.BlockSpec((tm, Cp), lambda i: (i, 0)),
                      pl.BlockSpec((1, Cp), lambda i: (0, 0)),
                      pl.BlockSpec((1, Cp), lambda i: (0, 0))],
            out_specs=pl.BlockSpec((tm, Cp), lambda i: (i, 0))),
        compiler_params=pltpu.CompilerParams(
            dimension_semantics=("parallel",)),
    )
    return jax.jit(f)


# ----------------------------------------------------------------------------
# Pooling kernels: gridded over row tiles, k*k shifted windows as separate inputs
# ----------------------------------------------------------------------------

@functools.lru_cache(maxsize=None)
def _pool_call(kk, op, Mp, C):
    tm = _pick_tile(Mp, 512)

    def kernel(*refs):
        o_ref = refs[kk]
        acc = refs[0][...]
        if op == "max":
            for r in refs[1:kk]:
                acc = jnp.maximum(acc, r[...])
            o_ref[...] = acc
        else:
            for r in refs[1:kk]:
                acc = acc + r[...]
            o_ref[...] = acc * (1.0 / kk)

    spec = pl.BlockSpec((tm, C), lambda i: (i, 0))
    f = pl.pallas_call(
        kernel,
        out_shape=jax.ShapeDtypeStruct((Mp, C), jnp.float32),
        grid_spec=pltpu.PrefetchScalarGridSpec(
            num_scalar_prefetch=0,
            grid=(Mp // tm,),
            in_specs=[spec] * kk,
            out_specs=spec),
        compiler_params=pltpu.CompilerParams(
            dimension_semantics=("parallel",)),
    )
    return jax.jit(f)


def _pool2d(x, k, s, p, op):
    N, H, W, C = x.shape
    if p > 0:
        pad_val = -jnp.inf if op == "max" else 0.0
        x = jnp.pad(x, ((0, 0), (p, p), (p, p), (0, 0)), constant_values=pad_val)
    Ho = (H + 2 * p - k) // s + 1
    Wo = (W + 2 * p - k) // s + 1
    M = N * Ho * Wo
    Mp = _round_up(M, 128)
    wins = []
    for i in range(k):
        for j in range(k):
            win = x[:, i:i + (Ho - 1) * s + 1:s, j:j + (Wo - 1) * s + 1:s, :]
            win = win.reshape(M, C)
            if Mp != M:
                win = jnp.pad(win, ((0, Mp - M), (0, 0)))
            wins.append(win)
    out = _pool_call(k * k, op, Mp, C)(*wins)
    return out[:M].reshape(N, Ho, Wo, C)


def maxpool2d(x, k, s, p):
    return _pool2d(x, k, s, p, "max")


def avgpool2d(x, k, s):
    return _pool2d(x, k, s, 0, "mean")


# norm5 + ReLU + adaptive_avg_pool2d((1,1)) fused into one small kernel.
def _gap_kernel(x_ref, s_ref, t_ref, o_ref):
    x = jnp.maximum(x_ref[...] * s_ref[...] + t_ref[...], 0.0)   # (HW, Npad, C)
    o_ref[...] = jnp.sum(x, axis=0) * (1.0 / x_ref.shape[0])     # (Npad, C)


@functools.lru_cache(maxsize=None)
def _gap_call(HW, Npad, C):
    f = pl.pallas_call(
        _gap_kernel,
        out_shape=jax.ShapeDtypeStruct((Npad, C), jnp.float32))
    return jax.jit(f)


def _softmax_kernel(x_ref, o_ref):
    x = x_ref[...]
    m = jnp.max(x, axis=-1, keepdims=True)
    e = jnp.exp(x - m)
    o_ref[...] = e / jnp.sum(e, axis=-1, keepdims=True)


@functools.lru_cache(maxsize=None)
def _softmax_call(Mp, Np_):
    f = pl.pallas_call(
        _softmax_kernel,
        out_shape=jax.ShapeDtypeStruct((Mp, Np_), jnp.float32))
    return jax.jit(f)


def pallas_softmax(x):
    M, N_ = x.shape
    Mp, Np_ = _round_up(M, 8), _round_up(N_, 128)
    xp = jnp.pad(x, ((0, Mp - M), (0, Np_ - N_)), constant_values=-1e30)
    return _softmax_call(Mp, Np_)(xp)[:M, :N_]


# ----------------------------------------------------------------------------
# Convolution wrapper (im2col glue in JAX, MACs in Pallas)
# ----------------------------------------------------------------------------

def conv2d_im2col(x, wd, stride, padding):
    # TODO(synk): fuse im2col into the matmul K-axis (shifted-window index_map)
    # to avoid materializing the 9x cols array for 3x3 convs.
    kh, kw, cin = wd["kh"], wd["kw"], wd["cin"]
    N, H, W, C = x.shape
    assert C == cin
    xp = jnp.pad(x, ((0, 0), (padding, padding), (padding, padding), (0, 0)))
    Ho = (H + 2 * padding - kh) // stride + 1
    Wo = (W + 2 * padding - kw) // stride + 1
    M = N * Ho * Wo
    if kh == 1 and kw == 1 and stride == 1:
        cols = xp.reshape(M, cin).astype(jnp.bfloat16)
    else:
        pats = []
        for i in range(kh):
            for j in range(kw):
                pats.append(xp[:, i:i + (Ho - 1) * stride + 1:stride,
                               j:j + (Wo - 1) * stride + 1:stride, :]
                            .astype(jnp.bfloat16))
        cols = jnp.concatenate(pats, axis=-1).reshape(M, kh * kw * cin)
    out = pallas_matmul(cols, wd["w"])          # padded (Mp, Np) f32
    return out, (N, Ho, Wo, M)


# ----------------------------------------------------------------------------
# DenseNet-121 parameters and forward pass
# ----------------------------------------------------------------------------

def init_densenet121_params(key, in_channels=3, growth_rate=32,
                            block_config=(6, 12, 24, 16),
                            num_init_featuremaps=64, bn_size=4,
                            num_classes=1000):
    keys = iter(jax.random.split(key, 512))

    def conv_w(kh, kw, cin, cout):               # kaiming_normal_, fan_in, relu gain
        fan_in = kh * kw * cin
        w = (jax.random.normal(next(keys), (kh, kw, cin, cout), jnp.float32)
             * np.sqrt(2.0 / fan_in))
        K, N_ = kh * kw * cin, cout
        Kp, Np = _round_up(K, 128), _round_up(N_, 128)
        w2 = jnp.pad(w.reshape(K, N_), ((0, Kp - K), (0, Np - N_))).astype(jnp.bfloat16)
        return {"w": w2, "cout": cout, "kh": kh, "kw": kw, "cin": cin}

    def bn(c):                                   # weight=1, bias=0 (as in __init__)
        return (jnp.ones((c,), jnp.float32), jnp.zeros((c,), jnp.float32))

    params = {"conv0": conv_w(7, 7, in_channels, num_init_featuremaps),
              "norm0": bn(num_init_featuremaps)}
    nf = num_init_featuremaps
    blocks, transitions = [], []
    for bi, nl in enumerate(block_config):
        layers = []
        for li in range(nl):
            cin = nf + li * growth_rate
            layers.append(dict(
                norm1=bn(cin),
                conv1=conv_w(1, 1, cin, bn_size * growth_rate),
                norm2=bn(bn_size * growth_rate),
                conv2=conv_w(3, 3, bn_size * growth_rate, growth_rate)))
        blocks.append(layers)
        nf += nl * growth_rate
        if bi != len(block_config) - 1:
            transitions.append(dict(norm=bn(nf), conv=conv_w(1, 1, nf, nf // 2)))
            nf //= 2
    params["blocks"] = blocks
    params["transitions"] = transitions
    params["norm5"] = bn(nf)
    bound = 1.0 / np.sqrt(nf)
    fcw = jax.random.uniform(next(keys), (nf, num_classes), jnp.float32, -bound, bound)
    Kp, Np = _round_up(nf, 128), _round_up(num_classes, 128)
    params["fc_w"] = {"w": jnp.pad(fcw, ((0, Kp - nf), (0, Np - num_classes)))
                            .astype(jnp.bfloat16),
                      "cout": num_classes, "cin": nf}
    params["fc_b"] = jnp.zeros((num_classes,), jnp.float32)   # Linear bias = 0
    params["growth_rate"] = growth_rate
    return params


def _dense_layer(slab, mean_acc, inv_acc, lp, dims, growth, off):
    N, H, W, M, Mp = dims
    cin = off
    cinp = _round_up(cin, 128)

    # norm1 + relu1 + conv1 (1x1) fused: reads the raw slab's first cinp columns.
    g1, b1 = lp["norm1"]
    s1, t1 = _scale_shift(g1, b1, mean_acc, inv_acc, cinp)
    bott = pallas_bn_relu_matmul(slab, s1, t1, lp["conv1"]["w"])   # (Mp, 128)

    # norm2 + relu2 (explicit, since conv2 needs post-relu zero spatial padding)
    c_b = lp["conv1"]["cout"]
    cbp = _round_up(c_b, 128)
    m2, i2 = batch_stats(bott, M, c_b)
    g2, b2 = lp["norm2"]
    s2, t2 = _scale_shift(g2, b2, m2, i2, cbp)
    normed = _bn_relu_apply_call(Mp, cbp)(bott, s2, t2)
    normed = normed[:M, :c_b].reshape(N, H, W, c_b)

    # conv2 (3x3) -> new 32-channel group
    h, _ = conv2d_im2col(normed, lp["conv2"], stride=1, padding=1)  # (Mp, 128)

    # per-group batch statistics, reused by every later norm1 / transition / norm5
    mh, ih = batch_stats(h, M, growth)
    mean_acc = mean_acc.at[off:off + growth].set(mh[:growth])
    inv_acc = inv_acc.at[off:off + growth].set(ih[:growth])

    # TODO(synk): under whole-graph jit this dynamic_update_slice is in-place; an
    # input_output_aliases writeback on the conv2 matmul would avoid the eager copy.
    slab = jax.lax.dynamic_update_slice(slab, h[:, :growth], (0, off))
    return slab, mean_acc, inv_acc


def _dense_block(x, layers, growth):
    N, H, W, nf = x.shape
    M = N * H * W
    Mp = _round_up(M, 128)
    c_final = nf + len(layers) * growth
    c_slab = _round_up(c_final, 128)

    slab = jnp.pad(x.reshape(M, nf), ((0, Mp - M), (0, c_slab - nf)))
    mean_acc = jnp.zeros((c_slab,), jnp.float32)
    inv_acc = jnp.zeros((c_slab,), jnp.float32)
    m0, i0 = batch_stats(slab, M, nf)
    mean_acc = mean_acc.at[:nf].set(m0[:nf])
    inv_acc = inv_acc.at[:nf].set(i0[:nf])

    dims = (N, H, W, M, Mp)
    off = nf
    for lp in layers:
        slab, mean_acc, inv_acc = _dense_layer(slab, mean_acc, inv_acc, lp,
                                               dims, growth, off)
        off += growth
    return slab, mean_acc, inv_acc, (N, H, W, c_final, M, Mp)


def _transition(slab, mean_acc, inv_acc, tp, blk_dims):
    N, H, W, c_in, M, Mp = blk_dims
    g, b = tp["norm"]
    cinp = _round_up(c_in, 128)
    s, t = _scale_shift(g, b, mean_acc, inv_acc, cinp)
    out = pallas_bn_relu_matmul(slab, s, t, tp["conv"]["w"])       # norm+relu+1x1 conv
    c_out = tp["conv"]["cout"]
    act = out[:M, :c_out].reshape(N, H, W, c_out)
    return avgpool2d(act, 2, 2)


def densenet121_forward(params, x_nchw):
    growth = params["growth_rate"]
    x = jnp.transpose(x_nchw, (0, 2, 3, 1)).astype(jnp.float32)    # NCHW -> NHWC
    N = x.shape[0]

    # stem: conv0 -> norm0 -> relu0 -> pool0
    c0 = params["conv0"]
    out, (_, Ho, Wo, M) = conv2d_im2col(x, c0, stride=2, padding=3)
    Mp = out.shape[0]
    cout0 = c0["cout"]
    c0p = _round_up(cout0, 128)
    m0, i0 = batch_stats(out, M, cout0)
    g0, b0 = params["norm0"]
    s0, t0 = _scale_shift(g0, b0, m0, i0, c0p)
    act = _bn_relu_apply_call(Mp, c0p)(out, s0, t0)
    act = act[:M, :cout0].reshape(N, Ho, Wo, cout0)
    xcur = maxpool2d(act, 3, 2, 1)

    n_blocks = len(params["blocks"])
    slab = mean_acc = inv_acc = blk_dims = None
    for bi, layers in enumerate(params["blocks"]):
        slab, mean_acc, inv_acc, blk_dims = _dense_block(xcur, layers, growth)
        if bi != n_blocks - 1:
            xcur = _transition(slab, mean_acc, inv_acc,
                               params["transitions"][bi], blk_dims)

    # norm5 + F.relu + adaptive_avg_pool2d + flatten, fused in one kernel
    _, H, W, c_fin, M, _ = blk_dims
    c_slab = slab.shape[1]
    g5, b5 = params["norm5"]
    s5, t5 = _scale_shift(g5, b5, mean_acc, inv_acc, c_slab)
    HW = H * W
    x3 = jnp.transpose(slab[:M].reshape(N, HW, c_slab), (1, 0, 2))  # (HW, N, C)
    Npad = _round_up(N, 8)
    if Npad != N:
        x3 = jnp.pad(x3, ((0, 0), (0, Npad - N), (0, 0)))
    pooled = _gap_call(HW, Npad, c_slab)(x3, s5.reshape(1, 1, -1),
                                         t5.reshape(1, 1, -1))
    pooled = pooled[:N, :c_fin]

    nc = params["fc_w"]["cout"]
    logits = pallas_matmul(pooled, params["fc_w"]["w"])[:N, :nc] + params["fc_b"][None, :]
    probas = pallas_softmax(logits)
    return logits, probas


if __name__ == "__main__":
    key = jax.random.PRNGKey(0)
    pkey, xkey = jax.random.split(key)

    # Full DenseNet-121 topology (growth 32, blocks (6,12,24,16), 1000 classes);
    # small 32x32 input keeps every avg-pooled stage >= 1x1.
    params = init_densenet121_params(pkey)
    x = jax.random.normal(xkey, (2, 3, 32, 32), jnp.float32)   # NCHW like PyTorch

    logits, probas = densenet121_forward(params, x)
    jax.block_until_ready((logits, probas))

    assert logits.shape == (2, 1000) and probas.shape == (2, 1000)
    assert bool(jnp.all(jnp.isfinite(logits)))
    assert bool(jnp.all(jnp.abs(jnp.sum(probas, axis=1) - 1.0) < 1e-3))
    print("KERNEL_OK")
</pallas_src>

<mosaic_0001>
module attributes {stable_mosaic.version = 11 : i64} {
  func.func @_matmul_kernel(%arg0: i32, %arg1: i32, %arg2: i32, %arg3: memref<512x256xbf16, #tpu.memory_space<vmem>>, %arg4: memref<256x128xbf16, #tpu.memory_space<vmem>>, %arg5: memref<512x128xf32, #tpu.memory_space<vmem>>, %arg6: memref<512x128xf32, #tpu.memory_space<vmem>>) attributes {dimension_semantics = [#tpu.dimension_semantics<parallel>, #tpu.dimension_semantics<parallel>, #tpu.dimension_semantics<arbitrary>], iteration_bounds = array<i64: 1, 1, 1>, scalar_prefetch = 0 : i64, scratch_operands = 1 : i64, tpu.core_type = #tpu.core_type<tc>, window_params = [{transform_indices = @transform_0, window_bounds = array<i64: 512, 256>}, {transform_indices = @transform_1, window_bounds = array<i64: 256, 128>}, {transform_indices = @transform_2, window_bounds = array<i64: 512, 128>}]} {
    %c0_i32 = arith.constant 0 : i32
    %0 = arith.cmpi eq, %arg2, %c0_i32 : i32
    %1 = arith.extui %0 : i1 to i32
    %c0_i32_0 = arith.constant 0 : i32
    %2 = arith.cmpi ne, %1, %c0_i32_0 : i32
    scf.if %2 {
      %cst_10 = arith.constant 0.000000e+00 : f32
      %12 = vector.broadcast %cst_10 : f32 to vector<512x128xf32>
      %c0_11 = arith.constant 0 : index
      %c0_12 = arith.constant 0 : index
      %13 = vector.load %arg6[%c0_11, %c0_12] : memref<512x128xf32, #tpu.memory_space<vmem>>, vector<512x128xf32>
      tpu.vector_store %arg6[%c0_11, %c0_12], %12 {strides = array<i32>} : memref<512x128xf32, #tpu.memory_space<vmem>>, vector<512x128xf32>,
    } else {
    }
    %c0 = arith.constant 0 : index
    %c0_1 = arith.constant 0 : index
    %3 = vector.load %arg6[%c0, %c0_1] : memref<512x128xf32, #tpu.memory_space<vmem>>, vector<512x128xf32>
    %c0_2 = arith.constant 0 : index
    %c0_3 = arith.constant 0 : index
    %4 = vector.load %arg3[%c0_2, %c0_3] : memref<512x256xbf16, #tpu.memory_space<vmem>>, vector<512x256xbf16>
    %c0_4 = arith.constant 0 : index
    %c0_5 = arith.constant 0 : index
    %5 = vector.load %arg4[%c0_4, %c0_5] : memref<256x128xbf16, #tpu.memory_space<vmem>>, vector<256x128xbf16>
    %cst = arith.constant dense<0.000000e+00> : vector<512x128xf32>
    %6 = tpu.matmul %4, %5, %cst {dimension_numbers = #tpu.dot_dimension_numbers<[1], [0], [0], [1], [0, 0, 1, 1], [], []>} : vector<512x256xbf16>, vector<256x128xbf16>, vector<512x128xf32> -> vector<512x128xf32>
    %7 = arith.addf %3, %6 : vector<512x128xf32>
    %c0_6 = arith.constant 0 : index
    %c0_7 = arith.constant 0 : index
    %8 = vector.load %arg6[%c0_6, %c0_7] : memref<512x128xf32, #tpu.memory_space<vmem>>, vector<512x128xf32>
    tpu.vector_store %arg6[%c0_6, %c0_7], %7 {strides = array<i32>} : memref<512x128xf32, #tpu.memory_space<vmem>>, vector<512x128xf32>,
    %c0_i32_8 = arith.constant 0 : i32
    %9 = arith.cmpi eq, %arg2, %c0_i32_8 : i32
    %10 = arith.extui %9 : i1 to i32
    %c0_i32_9 = arith.constant 0 : i32
    %11 = arith.cmpi ne, %10, %c0_i32_9 : i32
    scf.if %11 {
      %c0_10 = arith.constant 0 : index
      %c0_11 = arith.constant 0 : index
      %12 = vector.load %arg6[%c0_10, %c0_11] : memref<512x128xf32, #tpu.memory_space<vmem>>, vector<512x128xf32>
      %c0_12 = arith.constant 0 : index
      %c0_13 = arith.constant 0 : index
      %13 = vector.load %arg5[%c0_12, %c0_13] : memref<512x128xf32, #tpu.memory_space<vmem>>, vector<512x128xf32>
      tpu.vector_store %arg5[%c0_12, %c0_13], %12 {strides = array<i32>} : memref<512x128xf32, #tpu.memory_space<vmem>>, vector<512x128xf32>,
    } else {
    }
    return
  }
  func.func @transform_0(%arg0: i32, %arg1: i32, %arg2: i32) -> (i32, i32) {
    %c0_i32 = arith.constant 0 : i32
    return %arg0, %arg2 : i32, i32
  }
  func.func @transform_1(%arg0: i32, %arg1: i32, %arg2: i32) -> (i32, i32) {
    %c0_i32 = arith.constant 0 : i32
    return %arg2, %arg1 : i32, i32
  }
  func.func @transform_2(%arg0: i32, %arg1: i32, %arg2: i32) -> (i32, i32) {
    %c0_i32 = arith.constant 0 : i32
    return %arg0, %arg1 : i32, i32
  }
}

</mosaic_0001>

<llo_original>
// kernel: tpu_custom_call.1
$region0: #{tpu_custom_call.1}
  #allocation0 [shape = 'u32[]', space=smem, size = 0x4, offset = 0x4, fixed_abs, tag = 'smem constant byte address 0x4 - core index']
  #allocation1 [shape = 'u32[144,128]{1,0:T(1,128)}', space=vmem, size = 0x12000, scoped, tag = 'internal scratch']
  #allocation2 [shape = 'f32[512,128]{1,0:T(8,128)}', space=vmem, size = 0x40000, scoped, tag = 'scratch operand']
  %s0 = inlined_call_operand.hbm [shape: bf16[512,256], index: 0, kind: input, shape index: {}]
  %s1 = inlined_call_operand.hbm [shape: bf16[256,128], index: 1, kind: input, shape index: {}]
  %s2 = inlined_call_operand.hbm [shape: f32[512,128], index: 2, kind: output, shape index: {}]
  %s3 = sld [smem:[#allocation0]]
  $region34: #{tpu_custom_call.1} parent=0
    _
  %s5 = ssub.s32 1, %s3
  %s6 = scalar_select 0, %s5, %s3
  $region1: #{tpu_custom_call.1} parent=0
    #allocation3 [shape = 'u8[262144]{0}', space=vmem, size = 0x40000, scoped, tag = 'input window, operand 0, single buffered']
    #allocation4 [shape = 's32[1]{0}', space=sflag, size = 0x4, scoped, tag = 'scoped memory for tpu_custom_call.1']
    #allocation5 [shape = 's32[1]{0}', space=sflag, size = 0x4, scoped, tag = 'scoped memory for tpu_custom_call.1']
    #allocation6 [shape = 'u8[65536]{0}', space=vmem, size = 0x10000, scoped, tag = 'input window, operand 1, single buffered']
    #allocation7 [shape = 's32[1]{0}', space=sflag, size = 0x4, scoped, tag = 'scoped memory for tpu_custom_call.1']
    #allocation8 [shape = 'u8[262144]{0}', space=vmem, size = 0x40000, scoped, tag = 'output window, operand 0, single buffered']
    %7 = vsyncpa [#allocation4], 0
    %8 = vsyncpa [#allocation7], 0
    %9 = vsyncpa [#allocation5], 0
    // Predicated region
    $region2: #{tpu_custom_call.1} parent=1 // pred_check
      _
    $region3: #{tpu_custom_call.1} parent=1 // pred_check_branch
      %11 = sbr.rel (0) target = $region5
    $region4: #{tpu_custom_call.1} parent=1 // pred_region
      %s13 = ssub.s32 8192, 8192
      %14 = vsyncadd [#allocation4], %s13
      %s15 = sshll.u32 [#allocation3], 4
      %s16 = int_to_ptr.vmem [resolvable:$true] %s15
      %21 = dma.hbm_to_vmem [thread:$0]  %s0, 8192, %s16, [#allocation4], 128, 128, 8
    $region5: #{tpu_custom_call.1} parent=1 // pred_fallthru
      _
    // Predicated region
    $region6: #{tpu_custom_call.1} parent=1 // pred_check
      _
    $region7: #{tpu_custom_call.1} parent=1 // pred_check_branch
      %23 = sbr.rel (0) target = $region9
    $region8: #{tpu_custom_call.1} parent=1 // pred_region
      %s25 = ssub.s32 2048, 2048
      %26 = vsyncadd [#allocation7], %s25
      %s27 = sshll.u32 [#allocation6], 4
      %s28 = int_to_ptr.vmem [resolvable:$true] %s27
      %33 = dma.hbm_to_vmem [thread:$0]  %s1, 2048, %s28, [#allocation7], 64, 64, 4
    $region9: #{tpu_custom_call.1} parent=1 // pred_fallthru
      _
    // Predicated region
    $region10: #{tpu_custom_call.1} parent=1 // pred_check
      _
    $region11: #{tpu_custom_call.1} parent=1 // pred_check_branch
      %35 = sbr.rel (0) target = $region13
    $region12: #{tpu_custom_call.1} parent=1 // pred_region
      %36 = dma.done [#allocation4], 8192
    $region13: #{tpu_custom_call.1} parent=1 // pred_fallthru
      _
    // Predicated region
    $region14: #{tpu_custom_call.1} parent=1 // pred_check
      _
    $region15: #{tpu_custom_call.1} parent=1 // pred_check_branch
      %38 = sbr.rel (0) target = $region17
    $region16: #{tpu_custom_call.1} parent=1 // pred_region
      %39 = dma.done [#allocation7], 2048
    $region17: #{tpu_custom_call.1} parent=1 // pred_fallthru
      _
    %p41 = scmp.eq.s32.totalorder 0, 0
    // Predicated region
    $region18: #{tpu_custom_call.1} parent=1 // pred_check
      %p42 = pneg %p41
    $region19: #{tpu_custom_call.1} parent=1 // pred_check_branch
      %44 = sbr.rel (%p42) target = $region21
    $region20: #{tpu_custom_call.1} parent=1 // pred_region
      %45 = vst [vmem:[#allocation2] sm:$0xff] 0.0
      %46 = vst [vmem:[#allocation2 + $0x8] sm:$0xff] 0.0
      %47 = vst [vmem:[#allocation2 + $0x10] sm:$0xff] 0.0
      %48 = vst [vmem:[#allocation2 + $0x18] sm:$0xff] 0.0
      %49 = vst [vmem:[#allocation2 + $0x20] sm:$0xff] 0.0
      %50 = vst [vmem:[#allocation2 + $0x28] sm:$0xff] 0.0
      %51 = vst [vmem:[#allocation2 + $0x30] sm:$0xff] 0.0
      %52 = vst [vmem:[#allocation2 + $0x38] sm:$0xff] 0.0
      %53 = vst [vmem:[#allocation2 + $0x40] sm:$0xff] 0.0
      %54 = vst [vmem:[#allocation2 + $0x48] sm:$0xff] 0.0
      %55 = vst [vmem:[#allocation2 + $0x50] sm:$0xff] 0.0
      %56 = vst [vmem:[#allocation2 + $0x58] sm:$0xff] 0.0
      %57 = vst [vmem:[#allocation2 + $0x60] sm:$0xff] 0.0
      %58 = vst [vmem:[#allocation2 + $0x68] sm:$0xff] 0.0
      %59 = vst [vmem:[#allocation2 + $0x70] sm:$0xff] 0.0
      %60 = vst [vmem:[#allocation2 + $0x78] sm:$0xff] 0.0
      %61 = vst [vmem:[#allocation2 + $0x80] sm:$0xff] 0.0
      %62 = vst [vmem:[#allocation2 + $0x88] sm:$0xff] 0.0
      %63 = vst [vmem:[#allocation2 + $0x90] sm:$0xff] 0.0
      %64 = vst [vmem:[#allocation2 + $0x98] sm:$0xff] 0.0
      %65 = vst [vmem:[#allocation2 + $0xa0] sm:$0xff] 0.0
      %66 = vst [vmem:[#allocation2 + $0xa8] sm:$0xff] 0.0
      %67 = vst [vmem:[#allocation2 + $0xb0] sm:$0xff] 0.0
      %68 = vst [vmem:[#allocation2 + $0xb8] sm:$0xff] 0.0
      %69 = vst [vmem:[#allocation2 + $0xc0] sm:$0xff] 0.0
      %70 = vst [vmem:[#allocation2 + $0xc8] sm:$0xff] 0.0
      %71 = vst [vmem:[#allocation2 + $0xd0] sm:$0xff] 0.0
      %72 = vst [vmem:[#allocation2 + $0xd8] sm:$0xff] 0.0
      %73 = vst [vmem:[#allocation2 + $0xe0] sm:$0xff] 0.0
      %74 = vst [vmem:[#allocation2 + $0xe8] sm:$0xff] 0.0
      %75 = vst [vmem:[#allocation2 + $0xf0] sm:$0xff] 0.0
      %76 = vst [vmem:[#allocation2 + $0xf8] sm:$0xff] 0.0
      %77 = vst [vmem:[#allocation2 + $0x100] sm:$0xff] 0.0
      %78 = vst [vmem:[#allocation2 + $0x108] sm:$0xff] 0.0
      %79 = vst [vmem:[#allocation2 + $0x110] sm:$0xff] 0.0
      %80 = vst [vmem:[#allocation2 + $0x118] sm:$0xff] 0.0
      %81 = vst [vmem:[#allocation2 + $0x120] sm:$0xff] 0.0
      %82 = vst [vmem:[#allocation2 + $0x128] sm:$0xff] 0.0
      %83 = vst [vmem:[#allocation2 + $0x130] sm:$0xff] 0.0
      %84 = vst [vmem:[#allocation2 + $0x138] sm:$0xff] 0.0
      %85 = vst [vmem:[#allocation2 + $0x140] sm:$0xff] 0.0
      %86 = vst [vmem:[#allocation2 + $0x148] sm:$0xff] 0.0
      %87 = vst [vmem:[#allocation2 + $0x150] sm:$0xff] 0.0
      %88 = vst [vmem:[#allocation2 + $0x158] sm:$0xff] 0.0
      %89 = vst [vmem:[#allocation2 + $0x160] sm:$0xff] 0.0
      %90 = vst [vmem:[#allocation2 + $0x168] sm:$0xff] 0.0
      %91 = vst [vmem:[#allocation2 + $0x170] sm:$0xff] 0.0
      %92 = vst [vmem:[#allocation2 + $0x178] sm:$0xff] 0.0
      %93 = vst [vmem:[#allocation2 + $0x180] sm:$0xff] 0.0
      %94 = vst [vmem:[#allocation2 + $0x188] sm:$0xff] 0.0
      %95 = vst [vmem:[#allocation2 + $0x190] sm:$0xff] 0.0
      %96 = vst [vmem:[#allocation2 + $0x198] sm:$0xff] 0.0
      %97 = vst [vmem:[#allocation2 + $0x1a0] sm:$0xff] 0.0
      %98 = vst [vmem:[#allocation2 + $0x1a8] sm:$0xff] 0.0
      %99 = vst [vmem:[#allocation2 + $0x1b0] sm:$0xff] 0.0
      %100 = vst [vmem:[#allocation2 + $0x1b8] sm:$0xff] 0.0
      %101 = vst [vmem:[#allocation2 + $0x1c0] sm:$0xff] 0.0
      %102 = vst [vmem:[#allocation2 + $0x1c8] sm:$0xff] 0.0
      %103 = vst [vmem:[#allocation2 + $0x1d0] sm:$0xff] 0.0
      %104 = vst [vmem:[#allocation2 + $0x1d8] sm:$0xff] 0.0
      %105 = vst [vmem:[#allocation2 + $0x1e0] sm:$0xff] 0.0
      %106 = vst [vmem:[#allocation2 + $0x1e8] sm:$0xff] 0.0
      %107 = vst [vmem:[#allocation2 + $0x1f0] sm:$0xff] 0.0
      %108 = vst [vmem:[#allocation2 + $0x1f8] sm:$0xff] 0.0
    $region21: #{tpu_custom_call.1} parent=1 // pred_fallthru
      _
    %v109 = vld [vmem:[#allocation2] sm:$0xff]
    %v110 = vld [vmem:[#allocation2 + $0x8] sm:$0xff]
    %v111 = vld [vmem:[#allocation2 + $0x10] sm:$0xff]
    %v112 = vld [vmem:[#allocation2 + $0x18] sm:$0xff]
    %v113 = vld [vmem:[#allocation2 + $0x20] sm:$0xff]
    %v114 = vld [vmem:[#allocation2 + $0x28] sm:$0xff]
    %v115 = vld [vmem:[#allocation2 + $0x30] sm:$0xff]
    %v116 = vld [vmem:[#allocation2 + $0x38] sm:$0xff]
    %v117 = vld [vmem:[#allocation2 + $0x40] sm:$0xff]
    %v118 = vld [vmem:[#allocation2 + $0x48] sm:$0xff]
    %v119 = vld [vmem:[#allocation2 + $0x50] sm:$0xff]
    %v120 = vld [vmem:[#allocation2 + $0x58] sm:$0xff]
    %v121 = vld [vmem:[#allocation2 + $0x60] sm:$0xff]
    %v122 = vld [vmem:[#allocation2 + $0x68] sm:$0xff]
    %v123 = vld [vmem:[#allocation2 + $0x70] sm:$0xff]
    %v124 = vld [vmem:[#allocation2 + $0x78] sm:$0xff]
    %v125 = vld [vmem:[#allocation2 + $0x80] sm:$0xff]
    %v126 = vld [vmem:[#allocation2 + $0x88] sm:$0xff]
    %v127 = vld [vmem:[#allocation2 + $0x90] sm:$0xff]
    %v128 = vld [vmem:[#allocation2 + $0x98] sm:$0xff]
    %v129 = vld [vmem:[#allocation2 + $0xa0] sm:$0xff]
    %v130 = vld [vmem:[#allocation2 + $0xa8] sm:$0xff]
    %v131 = vld [vmem:[#allocation2 + $0xb0] sm:$0xff]
    %v132 = vld [vmem:[#allocation2 + $0xb8] sm:$0xff]
    %v133 = vld [vmem:[#allocation2 + $0xc0] sm:$0xff]
    %v134 = vld [vmem:[#allocation2 + $0xc8] sm:$0xff]
    %v135 = vld [vmem:[#allocation2 + $0xd0] sm:$0xff]
    %v136 = vld [vmem:[#allocation2 + $0xd8] sm:$0xff]
    %v137 = vld [vmem:[#allocation2 + $0xe0] sm:$0xff]
    %v138 = vld [vmem:[#allocation2 + $0xe8] sm:$0xff]
    %v139 = vld [vmem:[#allocation2 + $0xf0] sm:$0xff]
    %v140 = vld [vmem:[#allocation2 + $0xf8] sm:$0xff]
    %v141 = vld [vmem:[#allocation2 + $0x100] sm:$0xff]
    %v142 = vld [vmem:[#allocation2 + $0x108] sm:$0xff]
    %v143 = vld [vmem:[#allocation2 + $0x110] sm:$0xff]
    %v144 = vld [vmem:[#allocation2 + $0x118] sm:$0xff]
    %v145 = vld [vmem:[#allocation2 + $0x120] sm:$0xff]
    %v146 = vld [vmem:[#allocation2 + $0x128] sm:$0xff]
    %v147 = vld [vmem:[#allocation2 + $0x130] sm:$0xff]
    %v148 = vld [vmem:[#allocation2 + $0x138] sm:$0xff]
    %v149 = vld [vmem:[#allocation2 + $0x140] sm:$0xff]
    %v150 = vld [vmem:[#allocation2 + $0x148] sm:$0xff]
    %v151 = vld [vmem:[#allocation2 + $0x150] sm:$0xff]
    %v152 = vld [vmem:[#allocation2 + $0x158] sm:$0xff]
    %v153 = vld [vmem:[#allocation2 + $0x160] sm:$0xff]
    %v154 = vld [vmem:[#allocation2 + $0x168] sm:$0xff]
    %v155 = vld [vmem:[#allocation2 + $0x170] sm:$0xff]
    %v156 = vld [vmem:[#allocation2 + $0x178] sm:$0xff]
    %v157 = vld [vmem:[#allocation2 + $0x180] sm:$0xff]
    %v158 = vld [vmem:[#allocation2 + $0x188] sm:$0xff]
    %v159 = vld [vmem:[#allocation2 + $0x190] sm:$0xff]
    %v160 = vld [vmem:[#allocation2 + $0x198] sm:$0xff]
    %v161 = vld [vmem:[#allocation2 + $0x1a0] sm:$0xff]
    %v162 = vld [vmem:[#allocation2 + $0x1a8] sm:$0xff]
    %v163 = vld [vmem:[#allocation2 + $0x1b0] sm:$0xff]
    %v164 = vld [vmem:[#allocation2 + $0x1b8] sm:$0xff]
    %v165 = vld [vmem:[#allocation2 + $0x1c0] sm:$0xff]
    %v166 = vld [vmem:[#allocation2 + $0x1c8] sm:$0xff]
    %v167 = vld [vmem:[#allocation2 + $0x1d0] sm:$0xff]
    %v168 = vld [vmem:[#allocation2 + $0x1d8] sm:$0xff]
    %v169 = vld [vmem:[#allocation2 + $0x1e0] sm:$0xff]
    %v170 = vld [vmem:[#allocation2 + $0x1e8] sm:$0xff]
    %v171 = vld [vmem:[#allocation2 + $0x1f0] sm:$0xff]
    %v172 = vld [vmem:[#allocation2 + $0x1f8] sm:$0xff]
    %v173 = vld [vmem:[#allocation3] sm:$0xff]
    %v174 = vld [vmem:[#allocation3 + $0x8] sm:$0xff]
    %v175 = vld [vmem:[#allocation3 + $0x10] sm:$0xff]
    %v176 = vld [vmem:[#allocation3 + $0x18] sm:$0xff]
    %v177 = vld [vmem:[#allocation3 + $0x20] sm:$0xff]
    %v178 = vld [vmem:[#allocation3 + $0x28] sm:$0xff]
    %v179 = vld [vmem:[#allocation3 + $0x30] sm:$0xff]
    %v180 = vld [vmem:[#allocation3 + $0x38] sm:$0xff]
    %v181 = vld [vmem:[#allocation3 + $0x40] sm:$0xff]
    %v182 = vld [vmem:[#allocation3 + $0x48] sm:$0xff]
    %v183 = vld [vmem:[#allocation3 + $0x50] sm:$0xff]
    %v184 = vld [vmem:[#allocation3 + $0x58] sm:$0xff]
    %v185 = vld [vmem:[#allocation3 + $0x60] sm:$0xff]
    %v186 = vld [vmem:[#allocation3 + $0x68] sm:$0xff]
    %v187 = vld [vmem:[#allocation3 + $0x70] sm:$0xff]
    %v188 = vld [vmem:[#allocation3 + $0x78] sm:$0xff]
    %v189 = vld [vmem:[#allocation3 + $0x80] sm:$0xff]
    %v190 = vld [vmem:[#allocation3 + $0x88] sm:$0xff]
    %v191 = vld [vmem:[#allocation3 + $0x90] sm:$0xff]
    %v192 = vld [vmem:[#allocation3 + $0x98] sm:$0xff]
    %v193 = vld [vmem:[#allocation3 + $0xa0] sm:$0xff]
    %v194 = vld [vmem:[#allocation3 + $0xa8] sm:$0xff]
    %v195 = vld [vmem:[#allocation3 + $0xb0] sm:$0xff]
    %v196 = vld [vmem:[#allocation3 + $0xb8] sm:$0xff]
    %v197 = vld [vmem:[#allocation3 + $0xc0] sm:$0xff]
    %v198 = vld [vmem:[#allocation3 + $0xc8] sm:$0xff]
    %v199 = vld [vmem:[#allocation3 + $0xd0] sm:$0xff]
    %v200 = vld [vmem:[#allocation3 + $0xd8] sm:$0xff]
    %v201 = vld [vmem:[#allocation3 + $0xe0] sm:$0xff]
    %v202 = vld [vmem:[#allocation3 + $0xe8] sm:$0xff]
    %v203 = vld [vmem:[#allocation3 + $0xf0] sm:$0xff]
    %v204 = vld [vmem:[#allocation3 + $0xf8] sm:$0xff]
    %v205 = vld [vmem:[#allocation3 + $0x100] sm:$0xff]
    %v206 = vld [vmem:[#allocation3 + $0x108] sm:$0xff]
    %v207 = vld [vmem:[#allocation3 + $0x110] sm:$0xff]
    %v208 = vld [vmem:[#allocation3 + $0x118] sm:$0xff]
    %v209 = vld [vmem:[#allocation3 + $0x120] sm:$0xff]
    %v210 = vld [vmem:[#allocation3 + $0x128] sm:$0xff]
    %v211 = vld [vmem:[#allocation3 + $0x130] sm:$0xff]
    %v212 = vld [vmem:[#allocation3 + $0x138] sm:$0xff]
    %v213 = vld [vmem:[#allocation3 + $0x140] sm:$0xff]
    %v214 = vld [vmem:[#allocation3 + $0x148] sm:$0xff]
    %v215 = vld [vmem:[#allocation3 + $0x150] sm:$0xff]
    %v216 = vld [vmem:[#allocation3 + $0x158] sm:$0xff]
    %v217 = vld [vmem:[#allocation3 + $0x160] sm:$0xff]
    %v218 = vld [vmem:[#allocation3 + $0x168] sm:$0xff]
    %v219 = vld [vmem:[#allocation3 + $0x170] sm:$0xff]
    %v220 = vld [vmem:[#allocation3 + $0x178] sm:$0xff]
    %v221 = vld [vmem:[#allocation3 + $0x180] sm:$0xff]
    %v222 = vld [vmem:[#allocation3 + $0x188] sm:$0xff]
    %v223 = vld [vmem:[#allocation3 + $0x190] sm:$0xff]
    %v224 = vld [vmem:[#allocation3 + $0x198] sm:$0xff]
    %v225 = vld [vmem:[#allocation3 + $0x1a0] sm:$0xff]
    %v226 = vld [vmem:[#allocation3 + $0x1a8] sm:$0xff]
    %v227 = vld [vmem:[#allocation3 + $0x1b0] sm:$0xff]
    %v228 = vld [vmem:[#allocation3 + $0x1b8] sm:$0xff]
    %v229 = vld [vmem:[#allocation3 + $0x1c0] sm:$0xff]
    %v230 = vld [vmem:[#allocation3 + $0x1c8] sm:$0xff]
    %v231 = vld [vmem:[#allocation3 + $0x1d0] sm:$0xff]
    %v232 = vld [vmem:[#allocation3 + $0x1d8] sm:$0xff]
    %v233 = vld [vmem:[#allocation3 + $0x1e0] sm:$0xff]
    %v234 = vld [vmem:[#allocation3 + $0x1e8] sm:$0xff]
    %v235 = vld [vmem:[#allocation3 + $0x1f0] sm:$0xff]
    %v236 = vld [vmem:[#allocation3 + $0x1f8] sm:$0xff]
    %v237 = vld [vmem:[#allocation6] sm:$0xf]
    %v238 = vld [vmem:[#allocation6 + $0x4] sm:$0xf]
    %v239 = vld [vmem:[#allocation6 + $0x8] sm:$0xf]
    %v240 = vld [vmem:[#allocation6 + $0xc] sm:$0xf]
    %v241 = vld [vmem:[#allocation6 + $0x10] sm:$0xf]
    %v242 = vld [vmem:[#allocation6 + $0x14] sm:$0xf]
    %v243 = vld [vmem:[#allocation6 + $0x18] sm:$0xf]
    %v244 = vld [vmem:[#allocation6 + $0x1c] sm:$0xf]
    %v245 = vld [vmem:[#allocation6 + $0x20] sm:$0xf]
    %v246 = vld [vmem:[#allocation6 + $0x24] sm:$0xf]
    %v247 = vld [vmem:[#allocation6 + $0x28] sm:$0xf]
    %v248 = vld [vmem:[#allocation6 + $0x2c] sm:$0xf]
    %v249 = vld [vmem:[#allocation6 + $0x30] sm:$0xf]
    %v250 = vld [vmem:[#allocation6 + $0x34] sm:$0xf]
    %v251 = vld [vmem:[#allocation6 + $0x38] sm:$0xf]
    %v252 = vld [vmem:[#allocation6 + $0x3c] sm:$0xf]
    %v253 = vld [vmem:[#allocation6 + $0x40] sm:$0xf]
    %v254 = vld [vmem:[#allocation6 + $0x44] sm:$0xf]
    %v255 = vld [vmem:[#allocation6 + $0x48] sm:$0xf]
    %v256 = vld [vmem:[#allocation6 + $0x4c] sm:$0xf]
    %v257 = vld [vmem:[#allocation6 + $0x50] sm:$0xf]
    %v258 = vld [vmem:[#allocation6 + $0x54] sm:$0xf]
    %v259 = vld [vmem:[#allocation6 + $0x58] sm:$0xf]
    %v260 = vld [vmem:[#allocation6 + $0x5c] sm:$0xf]
    %v261 = vld [vmem:[#allocation6 + $0x60] sm:$0xf]
    %v262 = vld [vmem:[#allocation6 + $0x64] sm:$0xf]
    %v263 = vld [vmem:[#allocation6 + $0x68] sm:$0xf]
    %v264 = vld [vmem:[#allocation6 + $0x6c] sm:$0xf]
    %v265 = vld [vmem:[#allocation6 + $0x70] sm:$0xf]
    %v266 = vld [vmem:[#allocation6 + $0x74] sm:$0xf]
    %v267 = vld [vmem:[#allocation6 + $0x78] sm:$0xf]
    %v268 = vld [vmem:[#allocation6 + $0x7c] sm:$0xf]
    %v333 = vunpack.c.l.b16 %v173
    %v334 = vunpack.c.h.b16 %v173
    %v335 = vunpack.c.l.b16 %v174
    %v336 = vunpack.c.h.b16 %v174
    %v337 = vunpack.c.l.b16 %v175
    %v338 = vunpack.c.h.b16 %v175
    %v339 = vunpack.c.l.b16 %v176
    %v340 = vunpack.c.h.b16 %v176
    %v341 = vunpack.c.l.b16 %v177
    %v342 = vunpack.c.h.b16 %v177
    %v343 = vunpack.c.l.b16 %v178
    %v344 = vunpack.c.h.b16 %v178
    %v345 = vunpack.c.l.b16 %v179
    %v346 = vunpack.c.h.b16 %v179
    %v347 = vunpack.c.l.b16 %v180
    %v348 = vunpack.c.h.b16 %v180
    %v349 = vunpack.c.l.b16 %v181
    %v350 = vunpack.c.h.b16 %v181
    %v351 = vunpack.c.l.b16 %v182
    %v352 = vunpack.c.h.b16 %v182
    %v353 = vunpack.c.l.b16 %v183
    %v354 = vunpack.c.h.b16 %v183
    %v355 = vunpack.c.l.b16 %v184
    %v356 = vunpack.c.h.b16 %v184
    %v357 = vunpack.c.l.b16 %v185
    %v358 = vunpack.c.h.b16 %v185
    %v359 = vunpack.c.l.b16 %v186
    %v360 = vunpack.c.h.b16 %v186
    %v361 = vunpack.c.l.b16 %v187
    %v362 = vunpack.c.h.b16 %v187
    %v363 = vunpack.c.l.b16 %v188
    %v364 = vunpack.c.h.b16 %v188
    %v365 = vunpack.c.l.b16 %v189
    %v366 = vunpack.c.h.b16 %v189
    %v367 = vunpack.c.l.b16 %v190
    %v368 = vunpack.c.h.b16 %v190
    %v369 = vunpack.c.l.b16 %v191
    %v370 = vunpack.c.h.b16 %v191
    %v371 = vunpack.c.l.b16 %v192
    %v372 = vunpack.c.h.b16 %v192
    %v373 = vunpack.c.l.b16 %v193
    %v374 = vunpack.c.h.b16 %v193
    %v375 = vunpack.c.l.b16 %v194
    %v376 = vunpack.c.h.b16 %v194
    %v377 = vunpack.c.l.b16 %v195
    %v378 = vunpack.c.h.b16 %v195
    %v379 = vunpack.c.l.b16 %v196
    %v380 = vunpack.c.h.b16 %v196
    %v381 = vunpack.c.l.b16 %v197
    %v382 = vunpack.c.h.b16 %v197
    %v383 = vunpack.c.l.b16 %v198
    %v384 = vunpack.c.h.b16 %v198
    %v385 = vunpack.c.l.b16 %v199
    %v386 = vunpack.c.h.b16 %v199
    %v387 = vunpack.c.l.b16 %v200
    %v388 = vunpack.c.h.b16 %v200
    %v389 = vunpack.c.l.b16 %v201
    %v390 = vunpack.c.h.b16 %v201
    %v391 = vunpack.c.l.b16 %v202
    %v392 = vunpack.c.h.b16 %v202
    %v393 = vunpack.c.l.b16 %v203
    %v394 = vunpack.c.h.b16 %v203
    %v395 = vunpack.c.l.b16 %v204
    %v396 = vunpack.c.h.b16 %v204
    %v397 = vunpack.c.l.b16 %v205
    %v398 = vunpack.c.h.b16 %v205
    %v399 = vunpack.c.l.b16 %v206
    %v400 = vunpack.c.h.b16 %v206
    %v401 = vunpack.c.l.b16 %v207
    %v402 = vunpack.c.h.b16 %v207
    %v403 = vunpack.c.l.b16 %v208
    %v404 = vunpack.c.h.b16 %v208
    %v405 = vunpack.c.l.b16 %v209
    %v406 = vunpack.c.h.b16 %v209
    %v407 = vunpack.c.l.b16 %v210
    %v408 = vunpack.c.h.b16 %v210
    %v409 = vunpack.c.l.b16 %v211
    %v410 = vunpack.c.h.b16 %v211
    %v411 = vunpack.c.l.b16 %v212
    %v412 = vunpack.c.h.b16 %v212
    %v413 = vunpack.c.l.b16 %v213
    %v414 = vunpack.c.h.b16 %v213
    %v415 = vunpack.c.l.b16 %v214
    %v416 = vunpack.c.h.b16 %v214
    %v417 = vunpack.c.l.b16 %v215
    %v418 = vunpack.c.h.b16 %v215
    %v419 = vunpack.c.l.b16 %v216
    %v420 = vunpack.c.h.b16 %v216
    %v421 = vunpack.c.l.b16 %v217
    %v422 = vunpack.c.h.b16 %v217
    %v423 = vunpack.c.l.b16 %v218
    %v424 = vunpack.c.h.b16 %v218
    %v425 = vunpack.c.l.b16 %v219
    %v426 = vunpack.c.h.b16 %v219
    %v427 = vunpack.c.l.b16 %v220
    %v428 = vunpack.c.h.b16 %v220
    %v429 = vunpack.c.l.b16 %v221
    %v430 = vunpack.c.h.b16 %v221
    %v431 = vunpack.c.l.b16 %v222
    %v432 = vunpack.c.h.b16 %v222
    %v433 = vunpack.c.l.b16 %v223
    %v434 = vunpack.c.h.b16 %v223
    %v435 = vunpack.c.l.b16 %v224
    %v436 = vunpack.c.h.b16 %v224
    %v437 = vunpack.c.l.b16 %v225
    %v438 = vunpack.c.h.b16 %v225
    %v439 = vunpack.c.l.b16 %v226
    %v440 = vunpack.c.h.b16 %v226
    %v441 = vunpack.c.l.b16 %v227
    %v442 = vunpack.c.h.b16 %v227
    %v443 = vunpack.c.l.b16 %v228
    %v444 = vunpack.c.h.b16 %v228
    %v445 = vunpack.c.l.b16 %v229
    %v446 = vunpack.c.h.b16 %v229
    %v447 = vunpack.c.l.b16 %v230
    %v448 = vunpack.c.h.b16 %v230
    %v449 = vunpack.c.l.b16 %v231
    %v450 = vunpack.c.h.b16 %v231
    %v451 = vunpack.c.l.b16 %v232
    %v452 = vunpack.c.h.b16 %v232
    %v453 = vunpack.c.l.b16 %v233
    %v454 = vunpack.c.h.b16 %v233
    %v455 = vunpack.c.l.b16 %v234
    %v456 = vunpack.c.h.b16 %v234
    %v457 = vunpack.c.l.b16 %v235
    %v458 = vunpack.c.h.b16 %v235
    %v459 = vunpack.c.l.b16 %v236
    %v460 = vunpack.c.h.b16 %v236
    %v461 = vpack.c.b16 %v335, %v333
    %v462 = vpack.c.b16 %v336, %v334
    %v463 = vpack.c.b16 %v339, %v337
    %v464 = vpack.c.b16 %v340, %v338
    %v465 = vpack.c.b16 %v343, %v341
    %v466 = vpack.c.b16 %v344, %v342
    %v467 = vpack.c.b16 %v347, %v345
    %v468 = vpack.c.b16 %v348, %v346
    %v469 = vpack.c.b16 %v351, %v349
    %v470 = vpack.c.b16 %v352, %v350
    %v471 = vpack.c.b16 %v355, %v353
    %v472 = vpack.c.b16 %v356, %v354
    %v473 = vpack.c.b16 %v359, %v357
    %v474 = vpack.c.b16 %v360, %v358
    %v475 = vpack.c.b16 %v363, %v361
    %v476 = vpack.c.b16 %v364, %v362
    %v477 = vpack.c.b16 %v367, %v365
    %v478 = vpack.c.b16 %v368, %v366
    %v479 = vpack.c.b16 %v371, %v369
    %v480 = vpack.c.b16 %v372, %v370
    %v481 = vpack.c.b16 %v375, %v373
    %v482 = vpack.c.b16 %v376, %v374
    %v483 = vpack.c.b16 %v379, %v377
    %v484 = vpack.c.b16 %v380, %v378
    %v485 = vpack.c.b16 %v383, %v381
    %v486 = vpack.c.b16 %v384, %v382
    %v487 = vpack.c.b16 %v387, %v385
    %v488 = vpack.c.b16 %v388, %v386
    %v489 = vpack.c.b16 %v391, %v389
    %v490 = vpack.c.b16 %v392, %v390
    %v491 = vpack.c.b16 %v395, %v393
    %v492 = vpack.c.b16 %v396, %v394
    %v493 = vpack.c.b16 %v399, %v397
    %v494 = vpack.c.b16 %v400, %v398
    %v495 = vpack.c.b16 %v403, %v401
    %v496 = vpack.c.b16 %v404, %v402
    %v497 = vpack.c.b16 %v407, %v405
    %v498 = vpack.c.b16 %v408, %v406
    %v499 = vpack.c.b16 %v411, %v409
    %v500 = vpack.c.b16 %v412, %v410
    %v501 = vpack.c.b16 %v415, %v413
    %v502 = vpack.c.b16 %v416, %v414
    %v503 = vpack.c.b16 %v419, %v417
    %v504 = vpack.c.b16 %v420, %v418
    %v505 = vpack.c.b16 %v423, %v421
    %v506 = vpack.c.b16 %v424, %v422
    %v507 = vpack.c.b16 %v427, %v425
    %v508 = vpack.c.b16 %v428, %v426
    %v509 = vpack.c.b16 %v431, %v429
    %v510 = vpack.c.b16 %v432, %v430
    %v511 = vpack.c.b16 %v435, %v433
    %v512 = vpack.c.b16 %v436, %v434
    %v513 = vpack.c.b16 %v439, %v437
    %v514 = vpack.c.b16 %v440, %v438
    %v515 = vpack.c.b16 %v443, %v441
    %v516 = vpack.c.b16 %v444, %v442
    %v517 = vpack.c.b16 %v447, %v445
    %v518 = vpack.c.b16 %v448, %v446
    %v519 = vpack.c.b16 %v451, %v449
    %v520 = vpack.c.b16 %v452, %v450
    %v521 = vpack.c.b16 %v455, %v453
    %v522 = vpack.c.b16 %v456, %v454
    %v523 = vpack.c.b16 %v459, %v457
    %v524 = vpack.c.b16 %v460, %v458
    %v621 = vunpack.c.l.b16 %v237
    %v622 = vunpack.c.l.b16 %v238
    %v623 = vunpack.c.l.b16 %v239
    %v624 = vunpack.c.l.b16 %v240
    %v625 = vunpack.c.l.b16 %v241
    %v626 = vunpack.c.l.b16 %v242
    %v627 = vunpack.c.l.b16 %v243
    %v628 = vunpack.c.l.b16 %v244
    %v629 = vunpack.c.l.b16 %v245
    %v630 = vunpack.c.l.b16 %v246
    %v631 = vunpack.c.l.b16 %v247
    %v632 = vunpack.c.l.b16 %v248
    %v633 = vunpack.c.l.b16 %v249
    %v634 = vunpack.c.l.b16 %v250
    %v635 = vunpack.c.l.b16 %v251
    %v636 = vunpack.c.l.b16 %v252
    %v637 = vunpack.c.l.b16 %v253
    %v638 = vunpack.c.l.b16 %v254
    %v639 = vunpack.c.l.b16 %v255
    %v640 = vunpack.c.l.b16 %v256
    %v641 = vunpack.c.l.b16 %v257
    %v642 = vunpack.c.l.b16 %v258
    %v643 = vunpack.c.l.b16 %v259
    %v644 = vunpack.c.l.b16 %v260
    %v645 = vunpack.c.l.b16 %v261
    %v646 = vunpack.c.l.b16 %v262
    %v647 = vunpack.c.l.b16 %v263
    %v648 = vunpack.c.l.b16 %v264
    %v649 = vunpack.c.l.b16 %v265
    %v650 = vunpack.c.l.b16 %v266
    %v651 = vunpack.c.l.b16 %v267
    %v652 = vunpack.c.l.b16 %v268
    %v653 = vpack.c.b16 %v622, %v621
    %v654 = vpack.c.b16 %v624, %v623
    %v655 = vpack.c.b16 %v626, %v625
    %v656 = vpack.c.b16 %v628, %v627
    %v657 = vpack.c.b16 %v630, %v629
    %v658 = vpack.c.b16 %v632, %v631
    %v659 = vpack.c.b16 %v634, %v633
    %v660 = vpack.c.b16 %v636, %v635
    %v661 = vpack.c.b16 %v638, %v637
    %v662 = vpack.c.b16 %v640, %v639
    %v663 = vpack.c.b16 %v642, %v641
    %v664 = vpack.c.b16 %v644, %v643
    %v665 = vpack.c.b16 %v646, %v645
    %v666 = vpack.c.b16 %v648, %v647
    %v667 = vpack.c.b16 %v650, %v649
    %v668 = vpack.c.b16 %v652, %v651
    %685 = vmatprep.subr.bf16.mxu0 0
    %686 = vmatpush1.bf16.msra.mxu0 %v653
    %687 = vmatprep.subr.bf16.mxu0 0
    %688 = vmatpush1.bf16.msra.mxu0 %v654
    %689 = vmatprep.subr.bf16.mxu0 0
    %690 = vmatpush1.bf16.msra.mxu0 %v655
    %691 = vmatprep.subr.bf16.mxu0 0
    %692 = vmatpush1.bf16.msra.mxu0 %v656
    %693 = vmatprep.subr.bf16.mxu0 0
    %694 = vmatpush1.bf16.msra.mxu0 %v657
    %695 = vmatprep.subr.bf16.mxu0 0
    %696 = vmatpush1.bf16.msra.mxu0 %v658
    %697 = vmatprep.subr.bf16.mxu0 0
    %698 = vmatpush1.bf16.msra.mxu0 %v659
    %699 = vmatprep.subr.bf16.mxu0 0
    %700 = vmatpush1.bf16.msra.mxu0 %v660
    %701 = vmatprep.subr.bf16.mxu0 0
    %702 = vmatpush1.bf16.msra.mxu0 %v661
    %703 = vmatprep.subr.bf16.mxu0 0
    %704 = vmatpush1.bf16.msra.mxu0 %v662
    %705 = vmatprep.subr.bf16.mxu0 0
    %706 = vmatpush1.bf16.msra.mxu0 %v663
    %707 = vmatprep.subr.bf16.mxu0 0
    %708 = vmatpush1.bf16.msra.mxu0 %v664
    %709 = vmatprep.subr.bf16.mxu0 0
    %710 = vmatpush1.bf16.msra.mxu0 %v665
    %711 = vmatprep.subr.bf16.mxu0 0
    %712 = vmatpush1.bf16.msra.mxu0 %v666
    %713 = vmatprep.subr.bf16.mxu0 0
    %714 = vmatpush1.bf16.msra.mxu0 %v667
    %715 = vmatprep.subr.bf16.mxu0 0
    %716 = vmatpush1.bf16.msra.mxu0 %v668
    %717 = vmatprep.mubr.bf16.mxu0 %v462
    %718 = vmatmul.mubr.bf16.gmra.mrb[0].mxu0 %v461
    %v719 = vpop.f32.mrb[0].mxu0
    %v720 = vadd.f32 0.0, %v719
    %v721 = vpop.f32.mrb[0].mxu0
    %v722 = vpop.f32.mrb[0].mxu0
    %v723 = vadd.f32 0.0, %v722
    %v724 = vpop.f32.mrb[0].mxu0
    %725 = vmatprep.mubr.bf16.mxu0 %v464
    %726 = vmatmul.mubr.bf16.gmra.mrb[0].mxu0 %v463
    %v727 = vpop.f32.mrb[0].mxu0
    %v728 = vadd.f32 0.0, %v727
    %v729 = vpop.f32.mrb[0].mxu0
    %v730 = vpop.f32.mrb[0].mxu0
    %v731 = vadd.f32 0.0, %v730
    %v732 = vpop.f32.mrb[0].mxu0
    %733 = vmatprep.mubr.bf16.mxu0 %v466
    %734 = vmatmul.mubr.bf16.gmra.mrb[0].mxu0 %v465
    %v735 = vpop.f32.mrb[0].mxu0
    %v736 = vadd.f32 0.0, %v735
    %v737 = vpop.f32.mrb[0].mxu0
    %v738 = vpop.f32.mrb[0].mxu0
    %v739 = vadd.f32 0.0, %v738
    %v740 = vpop.f32.mrb[0].mxu0
    %741 = vmatprep.mubr.bf16.mxu0 %v468
    %742 = vmatmul.mubr.bf16.gmra.mrb[0].mxu0 %v467
    %v743 = vpop.f32.mrb[0].mxu0
    %v744 = vadd.f32 0.0, %v743
    %v745 = vpop.f32.mrb[0].mxu0
    %v746 = vpop.f32.mrb[0].mxu0
    %v747 = vadd.f32 0.0, %v746
    %v748 = vpop.f32.mrb[0].mxu0
    %749 = vmatprep.mubr.bf16.mxu0 %v470
    %750 = vmatmul.mubr.bf16.gmra.mrb[0].mxu0 %v469
    %v751 = vpop.f32.mrb[0].mxu0
    %v752 = vadd.f32 0.0, %v751
    %v753 = vpop.f32.mrb[0].mxu0
    %v754 = vpop.f32.mrb[0].mxu0
    %v755 = vadd.f32 0.0, %v754
    %v756 = vpop.f32.mrb[0].mxu0
    %757 = vmatprep.mubr.bf16.mxu0 %v472
    %758 = vmatmul.mubr.bf16.gmra.mrb[0].mxu0 %v471
    %v759 = vpop.f32.mrb[0].mxu0
    %v760 = vadd.f32 0.0, %v759
    %v761 = vpop.f32.mrb[0].mxu0
    %v762 = vpop.f32.mrb[0].mxu0
    %v763 = vadd.f32 0.0, %v762
    %v764 = vpop.f32.mrb[0].mxu0
    %765 = vmatprep.mubr.bf16.mxu0 %v474
    %766 = vmatmul.mubr.bf16.gmra.mrb[0].mxu0 %v473
    %v767 = vpop.f32.mrb[0].mxu0
    %v768 = vadd.f32 0.0, %v767
    %v769 = vpop.f32.mrb[0].mxu0
    %v770 = vpop.f32.mrb[0].mxu0
    %v771 = vadd.f32 0.0, %v770
    %v772 = vpop.f32.mrb[0].mxu0
    %773 = vmatprep.mubr.bf16.mxu0 %v476
    %774 = vmatmul.mubr.bf16.gmra.mrb[0].mxu0 %v475
    %v775 = vpop.f32.mrb[0].mxu0
    %v776 = vadd.f32 0.0, %v775
    %v777 = vpop.f32.mrb[0].mxu0
    %v778 = vpop.f32.mrb[0].mxu0
    %v779 = vadd.f32 0.0, %v778
    %v780 = vpop.f32.mrb[0].mxu0
    %781 = vmatprep.mubr.bf16.mxu0 %v478
    %782 = vmatmul.mubr.bf16.gmra.mrb[0].mxu0 %v477
    %v783 = vpop.f32.mrb[0].mxu0
    %v784 = vadd.f32 0.0, %v783
    %v785 = vpop.f32.mrb[0].mxu0
    %v786 = vpop.f32.mrb[0].mxu0
    %v787 = vadd.f32 0.0, %v786
    %v788 = vpop.f32.mrb[0].mxu0
    %789 = vmatprep.mubr.bf16.mxu0 %v480
    %790 = vmatmul.mubr.bf16.gmra.mrb[0].mxu0 %v479
    %v791 = vpop.f32.mrb[0].mxu0
    %v792 = vadd.f32 0.0, %v791
    %v793 = vpop.f32.mrb[0].mxu0
    %v794 = vpop.f32.mrb[0].mxu0
    %v795 = vadd.f32 0.0, %v794
    %v796 = vpop.f32.mrb[0].mxu0
    %797 = vmatprep.mubr.bf16.mxu0 %v482
    %798 = vmatmul.mubr.bf16.gmra.mrb[0].mxu0 %v481
    %v799 = vpop.f32.mrb[0].mxu0
    %v800 = vadd.f32 0.0, %v799
    %v801 = vpop.f32.mrb[0].mxu0
    %v802 = vpop.f32.mrb[0].mxu0
    %v803 = vadd.f32 0.0, %v802
    %v804 = vpop.f32.mrb[0].mxu0
    %805 = vmatprep.mubr.bf16.mxu0 %v484
    %806 = vmatmul.mubr.bf16.gmra.mrb[0].mxu0 %v483
    %v807 = vpop.f32.mrb[0].mxu0
    %v808 = vadd.f32 0.0, %v807
    %v809 = vpop.f32.mrb[0].mxu0
    %v810 = vpop.f32.mrb[0].mxu0
    %v811 = vadd.f32 0.0, %v810
    %v812 = vpop.f32.mrb[0].mxu0
    %813 = vmatprep.mubr.bf16.mxu0 %v486
    %814 = vmatmul.mubr.bf16.gmra.mrb[0].mxu0 %v485
    %v815 = vpop.f32.mrb[0].mxu0
    %v816 = vadd.f32 0.0, %v815
    %v817 = vpop.f32.mrb[0].mxu0
    %v818 = vpop.f32.mrb[0].mxu0
    %v819 = vadd.f32 0.0, %v818
    %v820 = vpop.f32.mrb[0].mxu0
    %821 = vmatprep.mubr.bf16.mxu0 %v488
    %822 = vmatmul.mubr.bf16.gmra.mrb[0].mxu0 %v487
    %v823 = vpop.f32.mrb[0].mxu0
    %v824 = vadd.f32 0.0, %v823
    %v825 = vpop.f32.mrb[0].mxu0
    %v826 = vpop.f32.mrb[0].mxu0
    %v827 = vadd.f32 0.0, %v826
    %v828 = vpop.f32.mrb[0].mxu0
    %829 = vmatprep.mubr.bf16.mxu0 %v490
    %830 = vmatmul.mubr.bf16.gmra.mrb[0].mxu0 %v489
    %v831 = vpop.f32.mrb[0].mxu0
    %v832 = vadd.f32 0.0, %v831
    %v833 = vpop.f32.mrb[0].mxu0
    %v834 = vpop.f32.mrb[0].mxu0
    %v835 = vadd.f32 0.0, %v834
    %v836 = vpop.f32.mrb[0].mxu0
    %837 = vmatprep.mubr.bf16.mxu0 %v492
    %838 = vmatmul.mubr.bf16.gmra.mrb[0].mxu0 %v491
    %v839 = vpop.f32.mrb[0].mxu0
    %v840 = vadd.f32 0.0, %v839
    %v841 = vpop.f32.mrb[0].mxu0
    %v842 = vpop.f32.mrb[0].mxu0
    %v843 = vadd.f32 0.0, %v842
    %v844 = vpop.f32.mrb[0].mxu0
    %845 = vmatprep.mubr.bf16.mxu0 %v494
    %846 = vmatmul.mubr.bf16.gmra.mrb[0].mxu0 %v493
    %v847 = vpop.f32.mrb[0].mxu0
    %v848 = vadd.f32 0.0, %v847
    %v849 = vpop.f32.mrb[0].mxu0
    %v850 = vpop.f32.mrb[0].mxu0
    %v851 = vadd.f32 0.0, %v850
    %v852 = vpop.f32.mrb[0].mxu0
    %853 = vmatprep.mubr.bf16.mxu0 %v496
    %854 = vmatmul.mubr.bf16.gmra.mrb[0].mxu0 %v495
    %v855 = vpop.f32.mrb[0].mxu0
    %v856 = vadd.f32 0.0, %v855
    %v857 = vpop.f32.mrb[0].mxu0
    %v858 = vpop.f32.mrb[0].mxu0
    %v859 = vadd.f32 0.0, %v858
    %v860 = vpop.f32.mrb[0].mxu0
    %861 = vmatprep.mubr.bf16.mxu0 %v498
    %862 = vmatmul.mubr.bf16.gmra.mrb[0].mxu0 %v497
    %v863 = vpop.f32.mrb[0].mxu0
    %v864 = vadd.f32 0.0, %v863
    %v865 = vpop.f32.mrb[0].mxu0
    %v866 = vpop.f32.mrb[0].mxu0
    %v867 = vadd.f32 0.0, %v866
    %v868 = vpop.f32.mrb[0].mxu0
    %869 = vmatprep.mubr.bf16.mxu0 %v500
    %870 = vmatmul.mubr.bf16.gmra.mrb[0].mxu0 %v499
    %v871 = vpop.f32.mrb[0].mxu0
    %v872 = vadd.f32 0.0, %v871
    %v873 = vpop.f32.mrb[0].mxu0
    %v874 = vpop.f32.mrb[0].mxu0
    %v875 = vadd.f32 0.0, %v874
    %v876 = vpop.f32.mrb[0].mxu0
    %877 = vmatprep.mubr.bf16.mxu0 %v502
    %878 = vmatmul.mubr.bf16.gmra.mrb[0].mxu0 %v501
    %v879 = vpop.f32.mrb[0].mxu0
    %v880 = vadd.f32 0.0, %v879
    %v881 = vpop.f32.mrb[0].mxu0
    %v882 = vpop.f32.mrb[0].mxu0
    %v883 = vadd.f32 0.0, %v882
    %v884 = vpop.f32.mrb[0].mxu0
    %885 = vmatprep.mubr.bf16.mxu0 %v504
    %886 = vmatmul.mubr.bf16.gmra.mrb[0].mxu0 %v503
    %v887 = vpop.f32.mrb[0].mxu0
    %v888 = vadd.f32 0.0, %v887
    %v889 = vpop.f32.mrb[0].mxu0
    %v890 = vpop.f32.mrb[0].mxu0
    %v891 = vadd.f32 0.0, %v890
    %v892 = vpop.f32.mrb[0].mxu0
    %893 = vmatprep.mubr.bf16.mxu0 %v506
    %894 = vmatmul.mubr.bf16.gmra.mrb[0].mxu0 %v505
    %v895 = vpop.f32.mrb[0].mxu0
    %v896 = vadd.f32 0.0, %v895
    %v897 = vpop.f32.mrb[0].mxu0
    %v898 = vpop.f32.mrb[0].mxu0
    %v899 = vadd.f32 0.0, %v898
    %v900 = vpop.f32.mrb[0].mxu0
    %901 = vmatprep.mubr.bf16.mxu0 %v508
    %902 = vmatmul.mubr.bf16.gmra.mrb[0].mxu0 %v507
    %v903 = vpop.f32.mrb[0].mxu0
    %v904 = vadd.f32 0.0, %v903
    %v905 = vpop.f32.mrb[0].mxu0
    %v906 = vpop.f32.mrb[0].mxu0
    %v907 = vadd.f32 0.0, %v906
    %v908 = vpop.f32.mrb[0].mxu0
    %909 = vmatprep.mubr.bf16.mxu0 %v510
    %910 = vmatmul.mubr.bf16.gmra.mrb[0].mxu0 %v509
    %v911 = vpop.f32.mrb[0].mxu0
    %v912 = vadd.f32 0.0, %v911
    %v913 = vpop.f32.mrb[0].mxu0
    %v914 = vpop.f32.mrb[0].mxu0
    %v915 = vadd.f32 0.0, %v914
    %v916 = vpop.f32.mrb[0].mxu0
    %917 = vmatprep.mubr.bf16.mxu0 %v512
    %918 = vmatmul.mubr.bf16.gmra.mrb[0].mxu0 %v511
    %v919 = vpop.f32.mrb[0].mxu0
    %v920 = vadd.f32 0.0, %v919
    %v921 = vpop.f32.mrb[0].mxu0
    %v922 = vpop.f32.mrb[0].mxu0
    %v923 = vadd.f32 0.0, %v922
    %v924 = vpop.f32.mrb[0].mxu0
    %925 = vmatprep.mubr.bf16.mxu0 %v514
    %926 = vmatmul.mubr.bf16.gmra.mrb[0].mxu0 %v513
    %v927 = vpop.f32.mrb[0].mxu0
    %v928 = vadd.f32 0.0, %v927
    %v929 = vpop.f32.mrb[0].mxu0
    %v930 = vpop.f32.mrb[0].mxu0
    %v931 = vadd.f32 0.0, %v930
    %v932 = vpop.f32.mrb[0].mxu0
    %933 = vmatprep.mubr.bf16.mxu0 %v516
    %934 = vmatmul.mubr.bf16.gmra.mrb[0].mxu0 %v515
    %v935 = vpop.f32.mrb[0].mxu0
    %v936 = vadd.f32 0.0, %v935
    %v937 = vpop.f32.mrb[0].mxu0
    %v938 = vpop.f32.mrb[0].mxu0
    %v939 = vadd.f32 0.0, %v938
    %v940 = vpop.f32.mrb[0].mxu0
    %941 = vmatprep.mubr.bf16.mxu0 %v518
    %942 = vmatmul.mubr.bf16.gmra.mrb[0].mxu0 %v517
    %v943 = vpop.f32.mrb[0].mxu0
    %v944 = vadd.f32 0.0, %v943
    %v945 = vpop.f32.mrb[0].mxu0
    %v946 = vpop.f32.mrb[0].mxu0
    %v947 = vadd.f32 0.0, %v946
    %v948 = vpop.f32.mrb[0].mxu0
    %949 = vmatprep.mubr.bf16.mxu0 %v520
    %950 = vmatmul.mubr.bf16.gmra.mrb[0].mxu0 %v519
    %v951 = vpop.f32.mrb[0].mxu0
    %v952 = vadd.f32 0.0, %v951
    %v953 = vpop.f32.mrb[0].mxu0
    %v954 = vpop.f32.mrb[0].mxu0
    %v955 = vadd.f32 0.0, %v954
    %v956 = vpop.f32.mrb[0].mxu0
    %957 = vmatprep.mubr.bf16.mxu0 %v522
    %958 = vmatmul.mubr.bf16.gmra.mrb[0].mxu0 %v521
    %v959 = vpop.f32.mrb[0].mxu0
    %v960 = vadd.f32 0.0, %v959
    %v961 = vpop.f32.mrb[0].mxu0
    %v962 = vpop.f32.mrb[0].mxu0
    %v963 = vadd.f32 0.0, %v962
    %v964 = vpop.f32.mrb[0].mxu0
    %965 = vmatprep.mubr.bf16.mxu0 %v524
    %966 = vmatmul.mubr.bf16.gmra.mrb[0].mxu0 %v523
    %v967 = vpop.f32.mrb[0].mxu0
    %v968 = vadd.f32 0.0, %v967
    %v969 = vpop.f32.mrb[0].mxu0
    %v970 = vpop.f32.mrb[0].mxu0
    %v971 = vadd.f32 0.0, %v970
    %v972 = vpop.f32.mrb[0].mxu0
    %973 = vdwg.mxu0
    %v974 = vadd.f32 %v109, %v720
    %v975 = vadd.f32 %v110, %v723
    %v976 = vadd.f32 %v111, %v728
    %v977 = vadd.f32 %v112, %v731
    %v978 = vadd.f32 %v113, %v736
    %v979 = vadd.f32 %v114, %v739
    %v980 = vadd.f32 %v115, %v744
    %v981 = vadd.f32 %v116, %v747
    %v982 = vadd.f32 %v117, %v752
    %v983 = vadd.f32 %v118, %v755
    %v984 = vadd.f32 %v119, %v760
    %v985 = vadd.f32 %v120, %v763
    %v986 = vadd.f32 %v121, %v768
    %v987 = vadd.f32 %v122, %v771
    %v988 = vadd.f32 %v123, %v776
    %v989 = vadd.f32 %v124, %v779
    %v990 = vadd.f32 %v125, %v784
    %v991 = vadd.f32 %v126, %v787
    %v992 = vadd.f32 %v127, %v792
    %v993 = vadd.f32 %v128, %v795
    %v994 = vadd.f32 %v129, %v800
    %v995 = vadd.f32 %v130, %v803
    %v996 = vadd.f32 %v131, %v808
    %v997 = vadd.f32 %v132, %v811
    %v998 = vadd.f32 %v133, %v816
    %v999 = vadd.f32 %v134, %v819
    %v1000 = vadd.f32 %v135, %v824
    %v1001 = vadd.f32 %v136, %v827
    %v1002 = vadd.f32 %v137, %v832
    %v1003 = vadd.f32 %v138, %v835
    %v1004 = vadd.f32 %v139, %v840
    %v1005 = vadd.f32 %v140, %v843
    %v1006 = vadd.f32 %v141, %v848
    %v1007 = vadd.f32 %v142, %v851
    %v1008 = vadd.f32 %v143, %v856
    %v1009 = vadd.f32 %v144, %v859
    %v1010 = vadd.f32 %v145, %v864
    %v1011 = vadd.f32 %v146, %v867
    %v1012 = vadd.f32 %v147, %v872
    %v1013 = vadd.f32 %v148, %v875
    %v1014 = vadd.f32 %v149, %v880
    %v1015 = vadd.f32 %v150, %v883
    %v1016 = vadd.f32 %v151, %v888
    %v1017 = vadd.f32 %v152, %v891
    %v1018 = vadd.f32 %v153, %v896
    %v1019 = vadd.f32 %v154, %v899
    %v1020 = vadd.f32 %v155, %v904
    %v1021 = vadd.f32 %v156, %v907
    %v1022 = vadd.f32 %v157, %v912
    %v1023 = vadd.f32 %v158, %v915
    %v1024 = vadd.f32 %v159, %v920
    %v1025 = vadd.f32 %v160, %v923
    %v1026 = vadd.f32 %v161, %v928
    %v1027 = vadd.f32 %v162, %v931
    %v1028 = vadd.f32 %v163, %v936
    %v1029 = vadd.f32 %v164, %v939
    %v1030 = vadd.f32 %v165, %v944
    %v1031 = vadd.f32 %v166, %v947
    %v1032 = vadd.f32 %v167, %v952
    %v1033 = vadd.f32 %v168, %v955
    %v1034 = vadd.f32 %v169, %v960
    %v1035 = vadd.f32 %v170, %v963
    %v1036 = vadd.f32 %v171, %v968
    %v1037 = vadd.f32 %v172, %v971
    %1038 = vst [vmem:[#allocation2] sm:$0xff] %v974
    %1039 = vst [vmem:[#allocation2 + $0x8] sm:$0xff] %v975
    %1040 = vst [vmem:[#allocation2 + $0x10] sm:$0xff] %v976
    %1041 = vst [vmem:[#allocation2 + $0x18] sm:$0xff] %v977
    %1042 = vst [vmem:[#allocation2 + $0x20] sm:$0xff] %v978
    %1043 = vst [vmem:[#allocation2 + $0x28] sm:$0xff] %v979
    %1044 = vst [vmem:[#allocation2 + $0x30] sm:$0xff] %v980
    %1045 = vst [vmem:[#allocation2 + $0x38] sm:$0xff] %v981
    %1046 = vst [vmem:[#allocation2 + $0x40] sm:$0xff] %v982
    %1047 = vst [vmem:[#allocation2 + $0x48] sm:$0xff] %v983
    %1048 = vst [vmem:[#allocation2 + $0x50] sm:$0xff] %v984
    %1049 = vst [vmem:[#allocation2 + $0x58] sm:$0xff] %v985
    %1050 = vst [vmem:[#allocation2 + $0x60] sm:$0xff] %v986
    %1051 = vst [vmem:[#allocation2 + $0x68] sm:$0xff] %v987
    %1052 = vst [vmem:[#allocation2 + $0x70] sm:$0xff] %v988
    %1053 = vst [vmem:[#allocation2 + $0x78] sm:$0xff] %v989
    %1054 = vst [vmem:[#allocation2 + $0x80] sm:$0xff] %v990
    %1055 = vst [vmem:[#allocation2 + $0x88] sm:$0xff] %v991
    %1056 = vst [vmem:[#allocation2 + $0x90] sm:$0xff] %v992
    %1057 = vst [vmem:[#allocation2 + $0x98] sm:$0xff] %v993
    %1058 = vst [vmem:[#allocation2 + $0xa0] sm:$0xff] %v994
    %1059 = vst [vmem:[#allocation2 + $0xa8] sm:$0xff] %v995
    %1060 = vst [vmem:[#allocation2 + $0xb0] sm:$0xff] %v996
    %1061 = vst [vmem:[#allocation2 + $0xb8] sm:$0xff] %v997
    %1062 = vst [vmem:[#allocation2 + $0xc0] sm:$0xff] %v998
    %1063 = vst [vmem:[#allocation2 + $0xc8] sm:$0xff] %v999
    %1064 = vst [vmem:[#allocation2 + $0xd0] sm:$0xff] %v1000
    %1065 = vst [vmem:[#allocation2 + $0xd8] sm:$0xff] %v1001
    %1066 = vst [vmem:[#allocation2 + $0xe0] sm:$0xff] %v1002
    %1067 = vst [vmem:[#allocation2 + $0xe8] sm:$0xff] %v1003
    %1068 = vst [vmem:[#allocation2 + $0xf0] sm:$0xff] %v1004
    %1069 = vst [vmem:[#allocation2 + $0xf8] sm:$0xff] %v1005
    %1070 = vst [vmem:[#allocation2 + $0x100] sm:$0xff] %v1006
    %1071 = vst [vmem:[#allocation2 + $0x108] sm:$0xff] %v1007
    %1072 = vst [vmem:[#allocation2 + $0x110] sm:$0xff] %v1008
    %1073 = vst [vmem:[#allocation2 + $0x118] sm:$0xff] %v1009
    %1074 = vst [vmem:[#allocation2 + $0x120] sm:$0xff] %v1010
    %1075 = vst [vmem:[#allocation2 + $0x128] sm:$0xff] %v1011
    %1076 = vst [vmem:[#allocation2 + $0x130] sm:$0xff] %v1012
    %1077 = vst [vmem:[#allocation2 + $0x138] sm:$0xff] %v1013
    %1078 = vst [vmem:[#allocation2 + $0x140] sm:$0xff] %v1014
    %1079 = vst [vmem:[#allocation2 + $0x148] sm:$0xff] %v1015
    %1080 = vst [vmem:[#allocation2 + $0x150] sm:$0xff] %v1016
    %1081 = vst [vmem:[#allocation2 + $0x158] sm:$0xff] %v1017
    %1082 = vst [vmem:[#allocation2 + $0x160] sm:$0xff] %v1018
    %1083 = vst [vmem:[#allocation2 + $0x168] sm:$0xff] %v1019
    %1084 = vst [vmem:[#allocation2 + $0x170] sm:$0xff] %v1020
    %1085 = vst [vmem:[#allocation2 + $0x178] sm:$0xff] %v1021
    %1086 = vst [vmem:[#allocation2 + $0x180] sm:$0xff] %v1022
    %1087 = vst [vmem:[#allocation2 + $0x188] sm:$0xff] %v1023
    %1088 = vst [vmem:[#allocation2 + $0x190] sm:$0xff] %v1024
    %1089 = vst [vmem:[#allocation2 + $0x198] sm:$0xff] %v1025
    %1090 = vst [vmem:[#allocation2 + $0x1a0] sm:$0xff] %v1026
    %1091 = vst [vmem:[#allocation2 + $0x1a8] sm:$0xff] %v1027
    %1092 = vst [vmem:[#allocation2 + $0x1b0] sm:$0xff] %v1028
    %1093 = vst [vmem:[#allocation2 + $0x1b8] sm:$0xff] %v1029
    %1094 = vst [vmem:[#allocation2 + $0x1c0] sm:$0xff] %v1030
    %1095 = vst [vmem:[#allocation2 + $0x1c8] sm:$0xff] %v1031
    %1096 = vst [vmem:[#allocation2 + $0x1d0] sm:$0xff] %v1032
    %1097 = vst [vmem:[#allocation2 + $0x1d8] sm:$0xff] %v1033
    %1098 = vst [vmem:[#allocation2 + $0x1e0] sm:$0xff] %v1034
    %1099 = vst [vmem:[#allocation2 + $0x1e8] sm:$0xff] %v1035
    %1100 = vst [vmem:[#allocation2 + $0x1f0] sm:$0xff] %v1036
    %1101 = vst [vmem:[#allocation2 + $0x1f8] sm:$0xff] %v1037
    // Predicated region
    $region22: #{tpu_custom_call.1} parent=1 // pred_check
      %p1102 = pneg %p41
    $region23: #{tpu_custom_call.1} parent=1 // pred_check_branch
      %1104 = sbr.rel (%p1102) target = $region25
    $region24: #{tpu_custom_call.1} parent=1 // pred_region
      %v1105 = vld [vmem:[#allocation2] sm:$0xff]
      %v1106 = vld [vmem:[#allocation2 + $0x8] sm:$0xff]
      %v1107 = vld [vmem:[#allocation2 + $0x10] sm:$0xff]
      %v1108 = vld [vmem:[#allocation2 + $0x18] sm:$0xff]
      %v1109 = vld [vmem:[#allocation2 + $0x20] sm:$0xff]
      %v1110 = vld [vmem:[#allocation2 + $0x28] sm:$0xff]
      %v1111 = vld [vmem:[#allocation2 + $0x30] sm:$0xff]
      %v1112 = vld [vmem:[#allocation2 + $0x38] sm:$0xff]
      %v1113 = vld [vmem:[#allocation2 + $0x40] sm:$0xff]
      %v1114 = vld [vmem:[#allocation2 + $0x48] sm:$0xff]
      %v1115 = vld [vmem:[#allocation2 + $0x50] sm:$0xff]
      %v1116 = vld [vmem:[#allocation2 + $0x58] sm:$0xff]
      %v1117 = vld [vmem:[#allocation2 + $0x60] sm:$0xff]
      %v1118 = vld [vmem:[#allocation2 + $0x68] sm:$0xff]
      %v1119 = vld [vmem:[#allocation2 + $0x70] sm:$0xff]
      %v1120 = vld [vmem:[#allocation2 + $0x78] sm:$0xff]
      %v1121 = vld [vmem:[#allocation2 + $0x80] sm:$0xff]
      %v1122 = vld [vmem:[#allocation2 + $0x88] sm:$0xff]
      %v1123 = vld [vmem:[#allocation2 + $0x90] sm:$0xff]
      %v1124 = vld [vmem:[#allocation2 + $0x98] sm:$0xff]
      %v1125 = vld [vmem:[#allocation2 + $0xa0] sm:$0xff]
      %v1126 = vld [vmem:[#allocation2 + $0xa8] sm:$0xff]
      %v1127 = vld [vmem:[#allocation2 + $0xb0] sm:$0xff]
      %v1128 = vld [vmem:[#allocation2 + $0xb8] sm:$0xff]
      %v1129 = vld [vmem:[#allocation2 + $0xc0] sm:$0xff]
      %v1130 = vld [vmem:[#allocation2 + $0xc8] sm:$0xff]
      %v1131 = vld [vmem:[#allocation2 + $0xd0] sm:$0xff]
      %v1132 = vld [vmem:[#allocation2 + $0xd8] sm:$0xff]
      %v1133 = vld [vmem:[#allocation2 + $0xe0] sm:$0xff]
      %v1134 = vld [vmem:[#allocation2 + $0xe8] sm:$0xff]
      %v1135 = vld [vmem:[#allocation2 + $0xf0] sm:$0xff]
      %v1136 = vld [vmem:[#allocation2 + $0xf8] sm:$0xff]
      %v1137 = vld [vmem:[#allocation2 + $0x100] sm:$0xff]
      %v1138 = vld [vmem:[#allocation2 + $0x108] sm:$0xff]
      %v1139 = vld [vmem:[#allocation2 + $0x110] sm:$0xff]
      %v1140 = vld [vmem:[#allocation2 + $0x118] sm:$0xff]
      %v1141 = vld [vmem:[#allocation2 + $0x120] sm:$0xff]
      %v1142 = vld [vmem:[#allocation2 + $0x128] sm:$0xff]
      %v1143 = vld [vmem:[#allocation2 + $0x130] sm:$0xff]
      %v1144 = vld [vmem:[#allocation2 + $0x138] sm:$0xff]
      %v1145 = vld [vmem:[#allocation2 + $0x140] sm:$0xff]
      %v1146 = vld [vmem:[#allocation2 + $0x148] sm:$0xff]
      %v1147 = vld [vmem:[#allocation2 + $0x150] sm:$0xff]
      %v1148 = vld [vmem:[#allocation2 + $0x158] sm:$0xff]
      %v1149 = vld [vmem:[#allocation2 + $0x160] sm:$0xff]
      %v1150 = vld [vmem:[#allocation2 + $0x168] sm:$0xff]
      %v1151 = vld [vmem:[#allocation2 + $0x170] sm:$0xff]
      %v1152 = vld [vmem:[#allocation2 + $0x178] sm:$0xff]
      %v1153 = vld [vmem:[#allocation2 + $0x180] sm:$0xff]
      %v1154 = vld [vmem:[#allocation2 + $0x188] sm:$0xff]
      %v1155 = vld [vmem:[#allocation2 + $0x190] sm:$0xff]
      %v1156 = vld [vmem:[#allocation2 + $0x198] sm:$0xff]
      %v1157 = vld [vmem:[#allocation2 + $0x1a0] sm:$0xff]
      %v1158 = vld [vmem:[#allocation2 + $0x1a8] sm:$0xff]
      %v1159 = vld [vmem:[#allocation2 + $0x1b0] sm:$0xff]
      %v1160 = vld [vmem:[#allocation2 + $0x1b8] sm:$0xff]
      %v1161 = vld [vmem:[#allocation2 + $0x1c0] sm:$0xff]
      %v1162 = vld [vmem:[#allocation2 + $0x1c8] sm:$0xff]
      %v1163 = vld [vmem:[#allocation2 + $0x1d0] sm:$0xff]
      %v1164 = vld [vmem:[#allocation2 + $0x1d8] sm:$0xff]
      %v1165 = vld [vmem:[#allocation2 + $0x1e0] sm:$0xff]
      %v1166 = vld [vmem:[#allocation2 + $0x1e8] sm:$0xff]
      %v1167 = vld [vmem:[#allocation2 + $0x1f0] sm:$0xff]
      %v1168 = vld [vmem:[#allocation2 + $0x1f8] sm:$0xff]
      %1169 = vst [vmem:[#allocation8] sm:$0xff] %v1105
      %1170 = vst [vmem:[#allocation8 + $0x8] sm:$0xff] %v1106
      %1171 = vst [vmem:[#allocation8 + $0x10] sm:$0xff] %v1107
      %1172 = vst [vmem:[#allocation8 + $0x18] sm:$0xff] %v1108
      %1173 = vst [vmem:[#allocation8 + $0x20] sm:$0xff] %v1109
      %1174 = vst [vmem:[#allocation8 + $0x28] sm:$0xff] %v1110
      %1175 = vst [vmem:[#allocation8 + $0x30] sm:$0xff] %v1111
      %1176 = vst [vmem:[#allocation8 + $0x38] sm:$0xff] %v1112
      %1177 = vst [vmem:[#allocation8 + $0x40] sm:$0xff] %v1113
      %1178 = vst [vmem:[#allocation8 + $0x48] sm:$0xff] %v1114
      %1179 = vst [vmem:[#allocation8 + $0x50] sm:$0xff] %v1115
      %1180 = vst [vmem:[#allocation8 + $0x58] sm:$0xff] %v1116
      %1181 = vst [vmem:[#allocation8 + $0x60] sm:$0xff] %v1117
      %1182 = vst [vmem:[#allocation8 + $0x68] sm:$0xff] %v1118
      %1183 = vst [vmem:[#allocation8 + $0x70] sm:$0xff] %v1119
      %1184 = vst [vmem:[#allocation8 + $0x78] sm:$0xff] %v1120
      %1185 = vst [vmem:[#allocation8 + $0x80] sm:$0xff] %v1121
      %1186 = vst [vmem:[#allocation8 + $0x88] sm:$0xff] %v1122
      %1187 = vst [vmem:[#allocation8 + $0x90] sm:$0xff] %v1123
      %1188 = vst [vmem:[#allocation8 + $0x98] sm:$0xff] %v1124
      %1189 = vst [vmem:[#allocation8 + $0xa0] sm:$0xff] %v1125
      %1190 = vst [vmem:[#allocation8 + $0xa8] sm:$0xff] %v1126
      %1191 = vst [vmem:[#allocation8 + $0xb0] sm:$0xff] %v1127
      %1192 = vst [vmem:[#allocation8 + $0xb8] sm:$0xff] %v1128
      %1193 = vst [vmem:[#allocation8 + $0xc0] sm:$0xff] %v1129
      %1194 = vst [vmem:[#allocation8 + $0xc8] sm:$0xff] %v1130
      %1195 = vst [vmem:[#allocation8 + $0xd0] sm:$0xff] %v1131
      %1196 = vst [vmem:[#allocation8 + $0xd8] sm:$0xff] %v1132
      %1197 = vst [vmem:[#allocation8 + $0xe0] sm:$0xff] %v1133
      %1198 = vst [vmem:[#allocation8 + $0xe8] sm:$0xff] %v1134
      %1199 = vst [vmem:[#allocation8 + $0xf0] sm:$0xff] %v1135
      %1200 = vst [vmem:[#allocation8 + $0xf8] sm:$0xff] %v1136
      %1201 = vst [vmem:[#allocation8 + $0x100] sm:$0xff] %v1137
      %1202 = vst [vmem:[#allocation8 + $0x108] sm:$0xff] %v1138
      %1203 = vst [vmem:[#allocation8 + $0x110] sm:$0xff] %v1139
      %1204 = vst [vmem:[#allocation8 + $0x118] sm:$0xff] %v1140
      %1205 = vst [vmem:[#allocation8 + $0x120] sm:$0xff] %v1141
      %1206 = vst [vmem:[#allocation8 + $0x128] sm:$0xff] %v1142
      %1207 = vst [vmem:[#allocation8 + $0x130] sm:$0xff] %v1143
      %1208 = vst [vmem:[#allocation8 + $0x138] sm:$0xff] %v1144
      %1209 = vst [vmem:[#allocation8 + $0x140] sm:$0xff] %v1145
      %1210 = vst [vmem:[#allocation8 + $0x148] sm:$0xff] %v1146
      %1211 = vst [vmem:[#allocation8 + $0x150] sm:$0xff] %v1147
      %1212 = vst [vmem:[#allocation8 + $0x158] sm:$0xff] %v1148
      %1213 = vst [vmem:[#allocation8 + $0x160] sm:$0xff] %v1149
      %1214 = vst [vmem:[#allocation8 + $0x168] sm:$0xff] %v1150
      %1215 = vst [vmem:[#allocation8 + $0x170] sm:$0xff] %v1151
      %1216 = vst [vmem:[#allocation8 + $0x178] sm:$0xff] %v1152
      %1217 = vst [vmem:[#allocation8 + $0x180] sm:$0xff] %v1153
      %1218 = vst [vmem:[#allocation8 + $0x188] sm:$0xff] %v1154
      %1219 = vst [vmem:[#allocation8 + $0x190] sm:$0xff] %v1155
      %1220 = vst [vmem:[#allocation8 + $0x198] sm:$0xff] %v1156
      %1221 = vst [vmem:[#allocation8 + $0x1a0] sm:$0xff] %v1157
      %1222 = vst [vmem:[#allocation8 + $0x1a8] sm:$0xff] %v1158
      %1223 = vst [vmem:[#allocation8 + $0x1b0] sm:$0xff] %v1159
      %1224 = vst [vmem:[#allocation8 + $0x1b8] sm:$0xff] %v1160
      %1225 = vst [vmem:[#allocation8 + $0x1c0] sm:$0xff] %v1161
      %1226 = vst [vmem:[#allocation8 + $0x1c8] sm:$0xff] %v1162
      %1227 = vst [vmem:[#allocation8 + $0x1d0] sm:$0xff] %v1163
      %1228 = vst [vmem:[#allocation8 + $0x1d8] sm:$0xff] %v1164
      %1229 = vst [vmem:[#allocation8 + $0x1e0] sm:$0xff] %v1165
      %1230 = vst [vmem:[#allocation8 + $0x1e8] sm:$0xff] %v1166
      %1231 = vst [vmem:[#allocation8 + $0x1f0] sm:$0xff] %v1167
      %1232 = vst [vmem:[#allocation8 + $0x1f8] sm:$0xff] %v1168
    $region25: #{tpu_custom_call.1} parent=1 // pred_fallthru
      _
    // Predicated region
    $region26: #{tpu_custom_call.1} parent=1 // pred_check
      _
    $region27: #{tpu_custom_call.1} parent=1 // pred_check_branch
      %1234 = sbr.rel (0) target = $region29
    $region28: #{tpu_custom_call.1} parent=1 // pred_region
      %s1236 = ssub.s32 8192, 8192
      %1237 = vsyncadd [#allocation5], %s1236
      %s1238 = sshll.u32 [#allocation8], 4
      %s1239 = int_to_ptr.vmem [resolvable:$true] %s1238
      %1244 = dma.vmem_to_hbm [thread:$0]  %s1239, 8192, %s2, [#allocation5], 128, 128, 8
    $region29: #{tpu_custom_call.1} parent=1 // pred_fallthru
      _
    // Predicated region
    $region30: #{tpu_custom_call.1} parent=1 // pred_check
      _
    $region31: #{tpu_custom_call.1} parent=1 // pred_check_branch
      %1246 = sbr.rel (0) target = $region33
    $region32: #{tpu_custom_call.1} parent=1 // pred_region
      %1247 = dma.done [#allocation5], 8192
    $region33: #{tpu_custom_call.1} parent=1 // pred_fallthru
      _
    %1248 = vsyncpa [#allocation4], 1
    %1249 = vsyncpa [#allocation7], 1
    %1250 = vsyncpa [#allocation5], 1

</llo_original>
